<compile_context>
chip_gen: v7x
topology: tpu7x:2x2x1
jax: 0.10.0
libtpu: 0.0.40
codegen_flags: <defaults>
</compile_context>

<pallas_src>
import functools

import jax
import jax.numpy as jnp
from jax import lax
from jax.experimental import pallas as pl
from jax.experimental.pallas import tpu as pltpu

_LANE = 128


def _round_up(x, m):
    return ((x + m - 1) // m) * m


def _device_kind():
    try:
        return jax.devices()[0].device_kind.lower()
    except Exception:
        return ""


def _num_tensorcores(kind):
    # Megacore parts (two TensorCores sharing HBM): v4, v5p, v7x.
    return 2 if any(t in kind for t in ("v4", "v5p", "v7")) else 1


def _default_act_dtype(kind):
    # v6e/v7x have bf16 VPU + EUP -> bf16 tanh / matmul inputs ~double EUP
    # throughput and halve activation vreg footprint.  v5e has neither, so the
    # casts would be pure VPU overhead; keep f32 there.
    if any(t in kind for t in ("v6", "v7", "trillium")):
        return jnp.bfloat16
    return jnp.float32


def _mlp_kernel(xt_ref, w1_ref, b1_ref, ws_ref, bs_ref, wl_ref, bl_ref, o_ref,
                *, n_mid, act_dtype, unrolled):
    # Transposed layout — batch on lanes:
    #   xt_ref : (8, T)  (K padded 3->8)   w1_ref : (H, 8)    b1_ref : (H, 1)
    #   ws_ref : (L, H, H)                 bs_ref : (L, H, 1)
    #   wl_ref : (H, 1)                    bl_ref : (1, 1)    o_ref  : (1, T)
    # First layer on the MXU (K=8, zero-padded); f32 accumulate, f32 bias.
    pre = jnp.dot(w1_ref[...], xt_ref[...],
                  preferred_element_type=jnp.float32) + b1_ref[...]
    h = jnp.tanh(pre.astype(act_dtype))                       # (H, T)

    # Middle layers: (H, H) @ (H, T) on the MXU (bf16 or f32 inputs,
    # f32 accumulation), bias add in f32, tanh in act_dtype on the EUP.
    def layer(l, h):
        acc = jnp.dot(ws_ref[l], h, preferred_element_type=jnp.float32)
        return jnp.tanh((acc + bs_ref[l]).astype(act_dtype))

    if unrolled:
        for l in range(n_mid):                                 # static unroll
            h = layer(l, h)
    else:
        h = lax.fori_loop(0, n_mid, layer, h)                  # deep stacks

    # Last layer (H -> 1) in f32: VPU multiply + sublane reduction -> (1, T).
    out = (jnp.sum(h.astype(jnp.float32) * wl_ref[...], axis=0, keepdims=True)
           + bl_ref[...])
    o_ref[...] = out.astype(o_ref.dtype)


def fitter_forward(x, params, *, tile_n_max=8192, activation_dtype=None):
    """Fitter MLP forward pass as a single Pallas kernel.

    x: (N, 3) float32 — any N (padded internally to a multiple of 128).
    params: dict with
        w1 (H, 3), b1 (H, 1)                      # fc1   (PyTorch (out, in) layout)
        ws (L-1, H, H), bs (L-1, H, 1)            # fcs
        wl (H, 1), bl (1, 1)                      # fcLast (stored transposed)
    Returns (N, 1) float32.
    """
    w1, b1, ws, bs, wl, bl = (
        params["w1"], params["b1"], params["ws"], params["bs"],
        params["wl"], params["bl"],
    )
    N, in_dim = x.shape
    assert in_dim == 3
    H = w1.shape[0]
    n_mid = ws.shape[0]

    kind = _device_kind()
    tc = _num_tensorcores(kind)
    act_dtype = activation_dtype or _default_act_dtype(kind)
    act_dtype = jnp.dtype(act_dtype)

    # ---- tile / grid selection --------------------------------------------
    # Pad the batch only to a 128-lane multiple, then pick a step count:
    #   * enough steps that each tile fits the lane / activation-VMEM caps,
    #   * a multiple of the TensorCore count on megacore parts (>= 2, even),
    #   * as few steps as possible on single-TC parts (per-step overhead).
    blocks = _round_up(max(N, 1), _LANE) // _LANE
    act_budget = 8 << 20                                   # live (H, T) temporaries
    max_blocks_act = max(1, act_budget // (3 * H * 4 * _LANE))
    max_tile_blocks = max(1, min(tile_n_max // _LANE, max_blocks_act))
    steps = pl.cdiv(blocks, max_tile_blocks)
    if blocks >= tc:
        steps = tc * pl.cdiv(max(steps, tc), tc)
    tile_blocks = pl.cdiv(blocks, steps)
    tile_n = tile_blocks * _LANE
    n_pad = steps * tile_n                                  # <= 128*steps extra lanes
    grid = (steps,)

    # ---- wrapper-side layout plumbing -------------------------------------
    # (For a training loop, keep collocation points stored pre-transposed /
    #  pre-padded as (8, n_pad) and feed them directly to avoid this per call.)
    xt = jnp.pad(x.T, ((0, 8 - 3), (0, n_pad - N)))         # (8, n_pad), K padded
    w1p = jnp.pad(w1, ((0, 0), (0, 8 - 3)))                 # (H, 8)
    n_mid_eff = max(n_mid, 1)
    if n_mid == 0:                                           # numHiddenLayers == 1
        ws_k = jnp.zeros((1, H, H), act_dtype)
        bs_k = jnp.zeros((1, H, 1), jnp.float32)
    else:
        ws_k = ws.astype(act_dtype)
        bs_k = bs.astype(jnp.float32)

    # ---- VMEM budget / pipelining ------------------------------------------
    weight_arrays = (w1p, b1, ws_k, bs_k, wl, bl)
    weight_bytes = sum(int(a.size) * jnp.dtype(a.dtype).itemsize
                       for a in weight_arrays)
    single_buffer_weights = weight_bytes > (4 << 20)         # matters only at large H
    io_bytes = 2 * (8 * tile_n * 4 + tile_n * 4)             # double-buffered xt/out
    live_act_bytes = 3 * H * tile_n * 4                      # f32 worst case
    wbuf = 1 if single_buffer_weights else 2
    vmem_limit = int(min(max(2 * (io_bytes + wbuf * weight_bytes
                                  + live_act_bytes), 24 << 20), 40 << 20))

    def wspec(shape):
        idx = (lambda i: (0,) * len(shape))
        if single_buffer_weights:
            return pl.BlockSpec(shape, idx, pipeline_mode=pl.Buffered(1))
        return pl.BlockSpec(shape, idx)

    kernel = functools.partial(
        _mlp_kernel, n_mid=n_mid, act_dtype=act_dtype, unrolled=(n_mid <= 8))

    flops = 2 * n_pad * (8 * H + n_mid * H * H + H)
    transcendentals = n_pad * H * (n_mid + 1)
    bytes_accessed = n_pad * 8 * 4 + n_pad * 4 + weight_bytes

    out = pl.pallas_call(
        kernel,
        out_shape=jax.ShapeDtypeStruct((1, n_pad), jnp.float32),
        grid=grid,
        in_specs=[
            pl.BlockSpec((8, tile_n), lambda i: (0, i)),      # x^T tile (K padded)
            wspec((H, 8)),                                    # w1 (padded)
            wspec((H, 1)),                                    # b1
            wspec((n_mid_eff, H, H)),                         # ws (stacked)
            wspec((n_mid_eff, H, 1)),                         # bs (stacked)
            wspec((H, 1)),                                    # wl (transposed)
            wspec((1, 1)),                                    # bl
        ],
        out_specs=pl.BlockSpec((1, tile_n), lambda i: (0, i)),  # lane-dense output
        compiler_params=pltpu.CompilerParams(
            dimension_semantics=("parallel",),                # megacore sharding
            vmem_limit_bytes=vmem_limit,
        ),
        cost_estimate=pl.CostEstimate(
            flops=flops,
            transcendentals=transcendentals,
            bytes_accessed=bytes_accessed,
        ),
    )(xt, w1p, b1, ws_k, bs_k, wl, bl)

    return out[0, :N].reshape(N, 1)


def init_fitter_params(key, num_hidden_nodes, num_hidden_layers):
    """Deterministic init mimicking PyTorch Linear defaults:
       U(-1/sqrt(fan_in), 1/sqrt(fan_in)) for both weights and biases.
       Weights kept in PyTorch (out, in) layout; biases as column vectors."""
    H = num_hidden_nodes
    n_mid = num_hidden_layers - 1
    ks = jax.random.split(key, 6)

    def uni(k, shape, fan_in):
        bound = 1.0 / jnp.sqrt(jnp.float32(fan_in))
        return jax.random.uniform(k, shape, jnp.float32, -bound, bound)

    return {
        "w1": uni(ks[0], (H, 3), 3),
        "b1": uni(ks[1], (H, 1), 3),
        "ws": uni(ks[2], (n_mid, H, H), H),
        "bs": uni(ks[3], (n_mid, H, 1), H),
        "wl": uni(ks[4], (H, 1), H),
        "bl": uni(ks[5], (1, 1), H),
    }


def fitter_reference(x, params):
    """Pure-JAX reference (matches PyTorch forward) for correctness checking."""
    h = jnp.tanh(x @ params["w1"].T + params["b1"].T)
    for l in range(params["ws"].shape[0]):
        h = jnp.tanh(h @ params["ws"][l].T + params["bs"][l].T)
    return h @ params["wl"] + params["bl"]


if __name__ == "__main__":
    num_hidden_nodes = 32
    num_hidden_layers = 3     # -> fc1, 2 middle layers, fcLast
    N = 1024                  # collocation points (x, t, nu), 3 features each

    key = jax.random.PRNGKey(0)
    k_params, k_x = jax.random.split(key)
    params = init_fitter_params(k_params, num_hidden_nodes, num_hidden_layers)
    x = jax.random.normal(k_x, (N, 3), jnp.float32)

    ref = fitter_reference(x, params)

    # Auto mode: bf16 activations on v6e/v7x, f32 on v5e; grid sized per chip.
    out = jax.block_until_ready(fitter_forward(x, params))
    assert out.shape == (N, 1)
    if _default_act_dtype(_device_kind()) == jnp.bfloat16:
        tol = dict(atol=3e-2, rtol=3e-2)
    else:
        tol = dict(atol=2e-5, rtol=1e-4)
    assert jnp.allclose(out, ref, **tol), float(jnp.max(jnp.abs(out - ref)))

    # Exact-precision path (f32 activations) against the f32 reference.
    out32 = jax.block_until_ready(
        fitter_forward(x, params, activation_dtype=jnp.float32))
    assert jnp.allclose(out32, ref, atol=2e-5, rtol=1e-4), (
        float(jnp.max(jnp.abs(out32 - ref))))

    print("KERNEL_OK")
</pallas_src>

<mosaic_0001>
module attributes {stable_mosaic.version = 11 : i64} {
  func.func @_mlp_kernel(%arg0: i32, %arg1: memref<8x1024xf32, #tpu.memory_space<vmem>>, %arg2: memref<32x8xf32, #tpu.memory_space<vmem>>, %arg3: memref<32x1xf32, #tpu.memory_space<vmem>>, %arg4: memref<2x32x32xf32, #tpu.memory_space<vmem>>, %arg5: memref<2x32x1xf32, #tpu.memory_space<vmem>>, %arg6: memref<32x1xf32, #tpu.memory_space<vmem>>, %arg7: memref<1x1xf32, #tpu.memory_space<vmem>>, %arg8: memref<1x1024xf32, #tpu.memory_space<vmem>>) attributes {dimension_semantics = [#tpu.dimension_semantics<parallel>], iteration_bounds = array<i64: 1>, scalar_prefetch = 0 : i64, scratch_operands = 0 : i64, tpu.core_type = #tpu.core_type<tc>, window_params = [{transform_indices = @transform_0, window_bounds = array<i64: 8, 1024>}, {pipeline_mode = #tpu.pipeline_mode<synchronous>, transform_indices = @transform_1, window_bounds = array<i64: 32, 8>}, {pipeline_mode = #tpu.pipeline_mode<synchronous>, transform_indices = @transform_2, window_bounds = array<i64: 32, 1>}, {pipeline_mode = #tpu.pipeline_mode<synchronous>, transform_indices = @transform_3, window_bounds = array<i64: 2, 32, 32>}, {pipeline_mode = #tpu.pipeline_mode<synchronous>, transform_indices = @transform_4, window_bounds = array<i64: 2, 32, 1>}, {pipeline_mode = #tpu.pipeline_mode<synchronous>, transform_indices = @transform_5, window_bounds = array<i64: 32, 1>}, {pipeline_mode = #tpu.pipeline_mode<synchronous>, transform_indices = @transform_6, window_bounds = array<i64: 1, 1>}, {transform_indices = @transform_7, window_bounds = array<i64: 1, 1024>}]} {
    %c0 = arith.constant 0 : index
    %c0_0 = arith.constant 0 : index
    %0 = vector.load %arg2[%c0, %c0_0] : memref<32x8xf32, #tpu.memory_space<vmem>>, vector<32x8xf32>
    %c0_1 = arith.constant 0 : index
    %c0_2 = arith.constant 0 : index
    %1 = vector.load %arg1[%c0_1, %c0_2] : memref<8x1024xf32, #tpu.memory_space<vmem>>, vector<8x1024xf32>
    %cst = arith.constant dense<0.000000e+00> : vector<32x1024xf32>
    %2 = tpu.matmul %0, %1, %cst {dimension_numbers = #tpu.dot_dimension_numbers<[1], [0], [0], [1], [0, 0, 1, 1], [], []>} : vector<32x8xf32>, vector<8x1024xf32>, vector<32x1024xf32> -> vector<32x1024xf32>
    %c0_3 = arith.constant 0 : index
    %c0_4 = arith.constant 0 : index
    %3 = vector.load %arg3[%c0_3, %c0_4] : memref<32x1xf32, #tpu.memory_space<vmem>>, vector<32x1xf32>
    %4 = vector.broadcast %3 : vector<32x1xf32> to vector<32x1024xf32>
    %5 = arith.addf %2, %4 : vector<32x1024xf32>
    %6 = math.tanh %5 : vector<32x1024xf32>
    %c0_5 = arith.constant 0 : index
    %c0_6 = arith.constant 0 : index
    %c0_7 = arith.constant 0 : index
    %7 = vector.load %arg4[%c0_5, %c0_6, %c0_7] : memref<2x32x32xf32, #tpu.memory_space<vmem>>, vector<1x32x32xf32>
    %8 = vector.shape_cast %7 : vector<1x32x32xf32> to vector<32x32xf32>
    %cst_8 = arith.constant dense<0.000000e+00> : vector<32x1024xf32>
    %9 = tpu.matmul %8, %6, %cst_8 {dimension_numbers = #tpu.dot_dimension_numbers<[1], [0], [0], [1], [0, 0, 1, 1], [], []>} : vector<32x32xf32>, vector<32x1024xf32>, vector<32x1024xf32> -> vector<32x1024xf32>
    %c0_9 = arith.constant 0 : index
    %c0_10 = arith.constant 0 : index
    %c0_11 = arith.constant 0 : index
    %10 = vector.load %arg5[%c0_9, %c0_10, %c0_11] : memref<2x32x1xf32, #tpu.memory_space<vmem>>, vector<1x32x1xf32>
    %11 = vector.shape_cast %10 : vector<1x32x1xf32> to vector<32x1xf32>
    %12 = vector.broadcast %11 : vector<32x1xf32> to vector<32x1024xf32>
    %13 = arith.addf %9, %12 : vector<32x1024xf32>
    %14 = math.tanh %13 : vector<32x1024xf32>
    %c1 = arith.constant 1 : index
    %c0_12 = arith.constant 0 : index
    %c0_13 = arith.constant 0 : index
    %15 = vector.load %arg4[%c1, %c0_12, %c0_13] : memref<2x32x32xf32, #tpu.memory_space<vmem>>, vector<1x32x32xf32>
    %16 = vector.shape_cast %15 : vector<1x32x32xf32> to vector<32x32xf32>
    %cst_14 = arith.constant dense<0.000000e+00> : vector<32x1024xf32>
    %17 = tpu.matmul %16, %14, %cst_14 {dimension_numbers = #tpu.dot_dimension_numbers<[1], [0], [0], [1], [0, 0, 1, 1], [], []>} : vector<32x32xf32>, vector<32x1024xf32>, vector<32x1024xf32> -> vector<32x1024xf32>
    %c1_15 = arith.constant 1 : index
    %c0_16 = arith.constant 0 : index
    %c0_17 = arith.constant 0 : index
    %18 = vector.load %arg5[%c1_15, %c0_16, %c0_17] : memref<2x32x1xf32, #tpu.memory_space<vmem>>, vector<1x32x1xf32>
    %19 = vector.shape_cast %18 : vector<1x32x1xf32> to vector<32x1xf32>
    %20 = vector.broadcast %19 : vector<32x1xf32> to vector<32x1024xf32>
    %21 = arith.addf %17, %20 : vector<32x1024xf32>
    %22 = math.tanh %21 : vector<32x1024xf32>
    %c0_18 = arith.constant 0 : index
    %c0_19 = arith.constant 0 : index
    %23 = vector.load %arg6[%c0_18, %c0_19] : memref<32x1xf32, #tpu.memory_space<vmem>>, vector<32x1xf32>
    %24 = vector.broadcast %23 : vector<32x1xf32> to vector<32x1024xf32>
    %25 = arith.mulf %22, %24 : vector<32x1024xf32>
    %cst_20 = arith.constant dense<0.000000e+00> : vector<1024xf32>
    %26 = vector.multi_reduction <add>, %25, %cst_20 [0] : vector<32x1024xf32> to vector<1024xf32>
    %27 = vector.shape_cast %26 : vector<1024xf32> to vector<1x1024xf32>
    %c0_21 = arith.constant 0 : index
    %c0_22 = arith.constant 0 : index
    %28 = vector.load %arg7[%c0_21, %c0_22] : memref<1x1xf32, #tpu.memory_space<vmem>>, vector<1x1xf32>
    %29 = vector.broadcast %28 : vector<1x1xf32> to vector<1x1024xf32>
    %30 = arith.addf %27, %29 : vector<1x1024xf32>
    %c0_23 = arith.constant 0 : index
    %c0_24 = arith.constant 0 : index
    %31 = vector.load %arg8[%c0_23, %c0_24] : memref<1x1024xf32, #tpu.memory_space<vmem>>, vector<1x1024xf32>
    tpu.vector_store %arg8[%c0_23, %c0_24], %30 {strides = array<i32>} : memref<1x1024xf32, #tpu.memory_space<vmem>>, vector<1x1024xf32>,
    return
  }
  func.func @transform_0(%arg0: i32) -> (i32, i32) {
    %c0_i32 = arith.constant 0 : i32
    %c0_i32_0 = arith.constant 0 : i32
    return %c0_i32, %arg0 : i32, i32
  }
  func.func @transform_1(%arg0: i32) -> (i32, i32) {
    %c0_i32 = arith.constant 0 : i32
    %c0_i32_0 = arith.constant 0 : i32
    %c0_i32_1 = arith.constant 0 : i32
    return %c0_i32, %c0_i32_0 : i32, i32
  }
  func.func @transform_2(%arg0: i32) -> (i32, i32) {
    %c0_i32 = arith.constant 0 : i32
    %c0_i32_0 = arith.constant 0 : i32
    %c0_i32_1 = arith.constant 0 : i32
    return %c0_i32, %c0_i32_0 : i32, i32
  }
  func.func @transform_3(%arg0: i32) -> (i32, i32, i32) {
    %c0_i32 = arith.constant 0 : i32
    %c0_i32_0 = arith.constant 0 : i32
    %c0_i32_1 = arith.constant 0 : i32
    %c0_i32_2 = arith.constant 0 : i32
    return %c0_i32, %c0_i32_0, %c0_i32_1 : i32, i32, i32
  }
  func.func @transform_4(%arg0: i32) -> (i32, i32, i32) {
    %c0_i32 = arith.constant 0 : i32
    %c0_i32_0 = arith.constant 0 : i32
    %c0_i32_1 = arith.constant 0 : i32
    %c0_i32_2 = arith.constant 0 : i32
    return %c0_i32, %c0_i32_0, %c0_i32_1 : i32, i32, i32
  }
  func.func @transform_5(%arg0: i32) -> (i32, i32) {
    %c0_i32 = arith.constant 0 : i32
    %c0_i32_0 = arith.constant 0 : i32
    %c0_i32_1 = arith.constant 0 : i32
    return %c0_i32, %c0_i32_0 : i32, i32
  }
  func.func @transform_6(%arg0: i32) -> (i32, i32) {
    %c0_i32 = arith.constant 0 : i32
    %c0_i32_0 = arith.constant 0 : i32
    %c0_i32_1 = arith.constant 0 : i32
    return %c0_i32, %c0_i32_0 : i32, i32
  }
  func.func @transform_7(%arg0: i32) -> (i32, i32) {
    %c0_i32 = arith.constant 0 : i32
    %c0_i32_0 = arith.constant 0 : i32
    return %c0_i32, %arg0 : i32, i32
  }
}

</mosaic_0001>

<llo_original>
// kernel: tpu_custom_call.1
$region0: #{tpu_custom_call.1}
  #allocation0 [shape = 'u32[]', space=smem, size = 0x4, offset = 0x4, fixed_abs, tag = 'smem constant byte address 0x4 - core index']
  #allocation1 [shape = 'u32[144,128]{1,0:T(1,128)}', space=vmem, size = 0x12000, scoped, tag = 'internal scratch']
  #allocation2 [shape = 'f32[1,1]{1,0:T(1,128)S(1)}', space=vmem, size = 0x200, scoped, tag = 'scoped memory for tpu_custom_call.1']
  %s0 = inlined_call_operand.vmem [shape: f32[8,1024], index: 0, kind: input, shape index: {}]
  %s1 = inlined_call_operand.vmem [shape: f32[32,8], index: 1, kind: input, shape index: {}]
  %s2 = inlined_call_operand.vmem [shape: f32[32,1], index: 2, kind: input, shape index: {}]
  %s3 = inlined_call_operand.vmem [shape: f32[2,32,32], index: 3, kind: input, shape index: {}]
  %s4 = inlined_call_operand.vmem [shape: f32[2,32,1], index: 4, kind: input, shape index: {}]
  %s5 = inlined_call_operand.vmem [shape: f32[32,1], index: 5, kind: input, shape index: {}]
  %s6 = inlined_call_operand.<no memory space> [shape: f32[1,1], index: 6, kind: input, shape index: {}]
  %s7 = inlined_call_operand.hbm [shape: f32[1,1024], index: 7, kind: output, shape index: {}]
  %s8 = sld [smem:[#allocation0]]
  $region38: #{tpu_custom_call.1} parent=0
    _
  %s10 = ssub.s32 1, %s8
  %s11 = scalar_select 0, %s10, %s8
  %v12 = vstv %s6
  %13 = vst [vmem:[#allocation2] sm:$0x1] %v12
  $region1: #{tpu_custom_call.1} parent=0
    #allocation3 [shape = 'u8[4096]{0}', space=vmem, size = 0x1000, scoped, tag = 'output window, operand 0, single buffered']
    #allocation4 [shape = 's32[1]{0}', space=sflag, size = 0x4, scoped, tag = 'scoped memory for tpu_custom_call.1']
    %14 = vsyncpa [#allocation4], 0
    // Predicated region
    $region2: #{tpu_custom_call.1} parent=1 // pred_check
      _
    $region3: #{tpu_custom_call.1} parent=1 // pred_check_branch
      %16 = sbr.rel (0) target = $region5
    $region4: #{tpu_custom_call.1} parent=1 // pred_region
      _
    $region5: #{tpu_custom_call.1} parent=1 // pred_fallthru
      _
    // Predicated region
    $region6: #{tpu_custom_call.1} parent=1 // pred_check
      _
    $region7: #{tpu_custom_call.1} parent=1 // pred_check_branch
      %18 = sbr.rel (0) target = $region9
    $region8: #{tpu_custom_call.1} parent=1 // pred_region
      _
    $region9: #{tpu_custom_call.1} parent=1 // pred_fallthru
      _
    // Predicated region
    $region10: #{tpu_custom_call.1} parent=1 // pred_check
      _
    $region11: #{tpu_custom_call.1} parent=1 // pred_check_branch
      %20 = sbr.rel (0) target = $region13
    $region12: #{tpu_custom_call.1} parent=1 // pred_region
      _
    $region13: #{tpu_custom_call.1} parent=1 // pred_fallthru
      _
    // Predicated region
    $region14: #{tpu_custom_call.1} parent=1 // pred_check
      _
    $region15: #{tpu_custom_call.1} parent=1 // pred_check_branch
      %22 = sbr.rel (0) target = $region17
    $region16: #{tpu_custom_call.1} parent=1 // pred_region
      _
    $region17: #{tpu_custom_call.1} parent=1 // pred_fallthru
      _
    // Predicated region
    $region18: #{tpu_custom_call.1} parent=1 // pred_check
      _
    $region19: #{tpu_custom_call.1} parent=1 // pred_check_branch
      %24 = sbr.rel (0) target = $region21
    $region20: #{tpu_custom_call.1} parent=1 // pred_region
      _
    $region21: #{tpu_custom_call.1} parent=1 // pred_fallthru
      _
    // Predicated region
    $region22: #{tpu_custom_call.1} parent=1 // pred_check
      _
    $region23: #{tpu_custom_call.1} parent=1 // pred_check_branch
      %26 = sbr.rel (0) target = $region25
    $region24: #{tpu_custom_call.1} parent=1 // pred_region
      _
    $region25: #{tpu_custom_call.1} parent=1 // pred_fallthru
      _
    // Predicated region
    $region26: #{tpu_custom_call.1} parent=1 // pred_check
      _
    $region27: #{tpu_custom_call.1} parent=1 // pred_check_branch
      %28 = sbr.rel (0) target = $region29
    $region28: #{tpu_custom_call.1} parent=1 // pred_region
      _
    $region29: #{tpu_custom_call.1} parent=1 // pred_fallthru
      _
    %v29 = vld [vmem:[%s1] sm:$0xff]
    %v30 = vld [vmem:[%s1 + $0x8] sm:$0xff]
    %v31 = vld [vmem:[%s1 + $0x10] sm:$0xff]
    %v32 = vld [vmem:[%s1 + $0x18] sm:$0xff]
    %v33 = vld [vmem:[%s0] sm:$0xff]
    %v34 = vld [vmem:[%s0 + $0x8] sm:$0xff]
    %v35 = vld [vmem:[%s0 + $0x10] sm:$0xff]
    %v36 = vld [vmem:[%s0 + $0x18] sm:$0xff]
    %v37 = vld [vmem:[%s0 + $0x20] sm:$0xff]
    %v38 = vld [vmem:[%s0 + $0x28] sm:$0xff]
    %v39 = vld [vmem:[%s0 + $0x30] sm:$0xff]
    %v40 = vld [vmem:[%s0 + $0x38] sm:$0xff]
    %v41 = vld [vmem:[%s2] sm:$0xff]
    %v42 = vld [vmem:[%s2 + $0x8] sm:$0xff]
    %v43 = vld [vmem:[%s2 + $0x10] sm:$0xff]
    %v44 = vld [vmem:[%s2 + $0x18] sm:$0xff]
    %46 = vset.pattern.permute.xlu0 0
    %47 = vperm.xlu0 %46, %v41
    %v48 = vpop.permute.xlu0 %47
    %51 = vset.pattern.permute.xlu0 0
    %52 = vperm.xlu0 %51, %v42
    %v53 = vpop.permute.xlu0 %52
    %56 = vset.pattern.permute.xlu0 0
    %57 = vperm.xlu0 %56, %v43
    %v58 = vpop.permute.xlu0 %57
    %61 = vset.pattern.permute.xlu0 0
    %62 = vperm.xlu0 %61, %v44
    %v63 = vpop.permute.xlu0 %62
    %vm65 = vcmask 64512
    %v67 = vsel %vm65, %v29, 0
    %v70 = vsel %vm65, %v30, 0
    %v73 = vsel %vm65, %v31, 0
    %v76 = vsel %vm65, %v32, 0
    %78 = vmatprep.subr.mxu0 %v34
    %79 = vmatpush1.msra.mxu0 %v33
    %80 = vmatprep.subr.mxu0 0.0
    %81 = vmatpush1.msra.mxu0 0.0
    %82 = vmatprep.subr.mxu0 0.0
    %83 = vmatpush1.msra.mxu0 0.0
    %84 = vmatprep.subr.mxu0 0.0
    %85 = vmatpush1.msra.mxu0 0.0
    %86 = vmatprep.subr.mxu0 0.0
    %87 = vmatpush1.msra.mxu0 0.0
    %88 = vmatprep.subr.mxu0 0.0
    %89 = vmatpush1.msra.mxu0 0.0
    %90 = vmatprep.subr.mxu0 0.0
    %91 = vmatpush1.msra.mxu0 0.0
    %92 = vmatprep.subr.mxu0 0.0
    %93 = vmatpush1.msra.mxu0 0.0
    %94 = vmatprep.subr.mxu0 0.0
    %95 = vmatpush1.msra.mxu0 0.0
    %96 = vmatprep.subr.mxu0 0.0
    %97 = vmatpush1.msra.mxu0 0.0
    %98 = vmatprep.subr.mxu0 0.0
    %99 = vmatpush1.msra.mxu0 0.0
    %100 = vmatprep.subr.mxu0 0.0
    %101 = vmatpush1.msra.mxu0 0.0
    %102 = vmatprep.subr.mxu0 0.0
    %103 = vmatpush1.msra.mxu0 0.0
    %104 = vmatprep.subr.mxu0 0.0
    %105 = vmatpush1.msra.mxu0 0.0
    %106 = vmatprep.subr.mxu0 0.0
    %107 = vmatpush1.msra.mxu0 0.0
    %108 = vmatprep.subr.mxu0 0.0
    %109 = vmatpush1.msra.mxu0 0.0
    %110 = vmatprep.subr.mxu0 0.0
    %111 = vmatpush1.msra.mxu0 0.0
    %112 = vmatprep.subr.mxu0 0.0
    %113 = vmatpush1.msra.mxu0 0.0
    %114 = vmatprep.subr.mxu0 0.0
    %115 = vmatpush1.msra.mxu0 0.0
    %116 = vmatprep.subr.mxu0 0.0
    %117 = vmatpush1.msra.mxu0 0.0
    %118 = vmatprep.subr.mxu0 0.0
    %119 = vmatpush1.msra.mxu0 0.0
    %120 = vmatprep.subr.mxu0 0.0
    %121 = vmatpush1.msra.mxu0 0.0
    %122 = vmatprep.subr.mxu0 0.0
    %123 = vmatpush1.msra.mxu0 0.0
    %124 = vmatprep.subr.mxu0 0.0
    %125 = vmatpush1.msra.mxu0 0.0
    %126 = vmatprep.subr.mxu0 0.0
    %127 = vmatpush1.msra.mxu0 0.0
    %128 = vmatprep.subr.mxu0 0.0
    %129 = vmatpush1.msra.mxu0 0.0
    %130 = vmatprep.subr.mxu0 0.0
    %131 = vmatpush1.msra.mxu0 0.0
    %132 = vmatprep.subr.mxu0 0.0
    %133 = vmatpush1.msra.mxu0 0.0
    %134 = vmatprep.subr.mxu0 0.0
    %135 = vmatpush1.msra.mxu0 0.0
    %136 = vmatprep.subr.mxu0 0.0
    %137 = vmatpush1.msra.mxu0 0.0
    %138 = vmatprep.subr.mxu0 0.0
    %139 = vmatpush1.msra.mxu0 0.0
    %140 = vmatprep.subr.mxu0 0.0
    %141 = vmatpush1.msra.mxu0 0.0
    %142 = vmatprep.mubr.f32.mxu0 0.0
    %143 = vmatmul.mubr.f32.gmra.mrb[0].mxu0 %v67
    %v144 = vpop.f32.mrb[0].mxu0
    %v145 = vadd.f32 %v48, %v144
    %v146 = vpop.f32.mrb[0].mxu0
    %v147 = vadd.f32 %v48, %v146
    %148 = vmatprep.mubr.f32.mxu0 0.0
    %149 = vmatmul.mubr.f32.gmra.mrb[0].mxu0 %v70
    %v150 = vpop.f32.mrb[0].mxu0
    %v151 = vadd.f32 %v53, %v150
    %v152 = vpop.f32.mrb[0].mxu0
    %v153 = vadd.f32 %v53, %v152
    %154 = vmatprep.mubr.f32.mxu0 0.0
    %155 = vmatmul.mubr.f32.gmra.mrb[0].mxu0 %v73
    %v156 = vpop.f32.mrb[0].mxu0
    %v157 = vadd.f32 %v58, %v156
    %v158 = vpop.f32.mrb[0].mxu0
    %v159 = vadd.f32 %v58, %v158
    %160 = vmatprep.mubr.f32.mxu0 0.0
    %161 = vmatmul.mubr.f32.gmra.mrb[0].mxu0 %v76
    %v162 = vpop.f32.mrb[0].mxu0
    %v163 = vadd.f32 %v63, %v162
    %v164 = vpop.f32.mrb[0].mxu0
    %v165 = vadd.f32 %v63, %v164
    %166 = vdwg.mxu0
    %167 = vmatprep.subr.mxu0 %v36
    %168 = vmatpush1.msra.mxu0 %v35
    %169 = vmatprep.subr.mxu0 0.0
    %170 = vmatpush1.msra.mxu0 0.0
    %171 = vmatprep.subr.mxu0 0.0
    %172 = vmatpush1.msra.mxu0 0.0
    %173 = vmatprep.subr.mxu0 0.0
    %174 = vmatpush1.msra.mxu0 0.0
    %175 = vmatprep.subr.mxu0 0.0
    %176 = vmatpush1.msra.mxu0 0.0
    %177 = vmatprep.subr.mxu0 0.0
    %178 = vmatpush1.msra.mxu0 0.0
    %179 = vmatprep.subr.mxu0 0.0
    %180 = vmatpush1.msra.mxu0 0.0
    %181 = vmatprep.subr.mxu0 0.0
    %182 = vmatpush1.msra.mxu0 0.0
    %183 = vmatprep.subr.mxu0 0.0
    %184 = vmatpush1.msra.mxu0 0.0
    %185 = vmatprep.subr.mxu0 0.0
    %186 = vmatpush1.msra.mxu0 0.0
    %187 = vmatprep.subr.mxu0 0.0
    %188 = vmatpush1.msra.mxu0 0.0
    %189 = vmatprep.subr.mxu0 0.0
    %190 = vmatpush1.msra.mxu0 0.0
    %191 = vmatprep.subr.mxu0 0.0
    %192 = vmatpush1.msra.mxu0 0.0
    %193 = vmatprep.subr.mxu0 0.0
    %194 = vmatpush1.msra.mxu0 0.0
    %195 = vmatprep.subr.mxu0 0.0
    %196 = vmatpush1.msra.mxu0 0.0
    %197 = vmatprep.subr.mxu0 0.0
    %198 = vmatpush1.msra.mxu0 0.0
    %199 = vmatprep.subr.mxu0 0.0
    %200 = vmatpush1.msra.mxu0 0.0
    %201 = vmatprep.subr.mxu0 0.0
    %202 = vmatpush1.msra.mxu0 0.0
    %203 = vmatprep.subr.mxu0 0.0
    %204 = vmatpush1.msra.mxu0 0.0
    %205 = vmatprep.subr.mxu0 0.0
    %206 = vmatpush1.msra.mxu0 0.0
    %207 = vmatprep.subr.mxu0 0.0
    %208 = vmatpush1.msra.mxu0 0.0
    %209 = vmatprep.subr.mxu0 0.0
    %210 = vmatpush1.msra.mxu0 0.0
    %211 = vmatprep.subr.mxu0 0.0
    %212 = vmatpush1.msra.mxu0 0.0
    %213 = vmatprep.subr.mxu0 0.0
    %214 = vmatpush1.msra.mxu0 0.0
    %215 = vmatprep.subr.mxu0 0.0
    %216 = vmatpush1.msra.mxu0 0.0
    %217 = vmatprep.subr.mxu0 0.0
    %218 = vmatpush1.msra.mxu0 0.0
    %219 = vmatprep.subr.mxu0 0.0
    %220 = vmatpush1.msra.mxu0 0.0
    %221 = vmatprep.subr.mxu0 0.0
    %222 = vmatpush1.msra.mxu0 0.0
    %223 = vmatprep.subr.mxu0 0.0
    %224 = vmatpush1.msra.mxu0 0.0
    %225 = vmatprep.subr.mxu0 0.0
    %226 = vmatpush1.msra.mxu0 0.0
    %227 = vmatprep.subr.mxu0 0.0
    %228 = vmatpush1.msra.mxu0 0.0
    %229 = vmatprep.subr.mxu0 0.0
    %230 = vmatpush1.msra.mxu0 0.0
    %231 = vmatprep.mubr.f32.mxu0 0.0
    %232 = vmatmul.mubr.f32.gmra.mrb[0].mxu0 %v67
    %v233 = vpop.f32.mrb[0].mxu0
    %v234 = vadd.f32 %v48, %v233
    %v235 = vpop.f32.mrb[0].mxu0
    %v236 = vadd.f32 %v48, %v235
    %237 = vmatprep.mubr.f32.mxu0 0.0
    %238 = vmatmul.mubr.f32.gmra.mrb[0].mxu0 %v70
    %v239 = vpop.f32.mrb[0].mxu0
    %v240 = vadd.f32 %v53, %v239
    %v241 = vpop.f32.mrb[0].mxu0
    %v242 = vadd.f32 %v53, %v241
    %243 = vmatprep.mubr.f32.mxu0 0.0
    %244 = vmatmul.mubr.f32.gmra.mrb[0].mxu0 %v73
    %v245 = vpop.f32.mrb[0].mxu0
    %v246 = vadd.f32 %v58, %v245
    %v247 = vpop.f32.mrb[0].mxu0
    %v248 = vadd.f32 %v58, %v247
    %249 = vmatprep.mubr.f32.mxu0 0.0
    %250 = vmatmul.mubr.f32.gmra.mrb[0].mxu0 %v76
    %v251 = vpop.f32.mrb[0].mxu0
    %v252 = vadd.f32 %v63, %v251
    %v253 = vpop.f32.mrb[0].mxu0
    %v254 = vadd.f32 %v63, %v253
    %255 = vdwg.mxu0
    %256 = vmatprep.subr.mxu0 %v38
    %257 = vmatpush1.msra.mxu0 %v37
    %258 = vmatprep.subr.mxu0 0.0
    %259 = vmatpush1.msra.mxu0 0.0
    %260 = vmatprep.subr.mxu0 0.0
    %261 = vmatpush1.msra.mxu0 0.0
    %262 = vmatprep.subr.mxu0 0.0
    %263 = vmatpush1.msra.mxu0 0.0
    %264 = vmatprep.subr.mxu0 0.0
    %265 = vmatpush1.msra.mxu0 0.0
    %266 = vmatprep.subr.mxu0 0.0
    %267 = vmatpush1.msra.mxu0 0.0
    %268 = vmatprep.subr.mxu0 0.0
    %269 = vmatpush1.msra.mxu0 0.0
    %270 = vmatprep.subr.mxu0 0.0
    %271 = vmatpush1.msra.mxu0 0.0
    %272 = vmatprep.subr.mxu0 0.0
    %273 = vmatpush1.msra.mxu0 0.0
    %274 = vmatprep.subr.mxu0 0.0
    %275 = vmatpush1.msra.mxu0 0.0
    %276 = vmatprep.subr.mxu0 0.0
    %277 = vmatpush1.msra.mxu0 0.0
    %278 = vmatprep.subr.mxu0 0.0
    %279 = vmatpush1.msra.mxu0 0.0
    %280 = vmatprep.subr.mxu0 0.0
    %281 = vmatpush1.msra.mxu0 0.0
    %282 = vmatprep.subr.mxu0 0.0
    %283 = vmatpush1.msra.mxu0 0.0
    %284 = vmatprep.subr.mxu0 0.0
    %285 = vmatpush1.msra.mxu0 0.0
    %286 = vmatprep.subr.mxu0 0.0
    %287 = vmatpush1.msra.mxu0 0.0
    %288 = vmatprep.subr.mxu0 0.0
    %289 = vmatpush1.msra.mxu0 0.0
    %290 = vmatprep.subr.mxu0 0.0
    %291 = vmatpush1.msra.mxu0 0.0
    %292 = vmatprep.subr.mxu0 0.0
    %293 = vmatpush1.msra.mxu0 0.0
    %294 = vmatprep.subr.mxu0 0.0
    %295 = vmatpush1.msra.mxu0 0.0
    %296 = vmatprep.subr.mxu0 0.0
    %297 = vmatpush1.msra.mxu0 0.0
    %298 = vmatprep.subr.mxu0 0.0
    %299 = vmatpush1.msra.mxu0 0.0
    %300 = vmatprep.subr.mxu0 0.0
    %301 = vmatpush1.msra.mxu0 0.0
    %302 = vmatprep.subr.mxu0 0.0
    %303 = vmatpush1.msra.mxu0 0.0
    %304 = vmatprep.subr.mxu0 0.0
    %305 = vmatpush1.msra.mxu0 0.0
    %306 = vmatprep.subr.mxu0 0.0
    %307 = vmatpush1.msra.mxu0 0.0
    %308 = vmatprep.subr.mxu0 0.0
    %309 = vmatpush1.msra.mxu0 0.0
    %310 = vmatprep.subr.mxu0 0.0
    %311 = vmatpush1.msra.mxu0 0.0
    %312 = vmatprep.subr.mxu0 0.0
    %313 = vmatpush1.msra.mxu0 0.0
    %314 = vmatprep.subr.mxu0 0.0
    %315 = vmatpush1.msra.mxu0 0.0
    %316 = vmatprep.subr.mxu0 0.0
    %317 = vmatpush1.msra.mxu0 0.0
    %318 = vmatprep.subr.mxu0 0.0
    %319 = vmatpush1.msra.mxu0 0.0
    %320 = vmatprep.mubr.f32.mxu0 0.0
    %321 = vmatmul.mubr.f32.gmra.mrb[0].mxu0 %v67
    %v322 = vpop.f32.mrb[0].mxu0
    %v323 = vadd.f32 %v48, %v322
    %v324 = vpop.f32.mrb[0].mxu0
    %v325 = vadd.f32 %v48, %v324
    %326 = vmatprep.mubr.f32.mxu0 0.0
    %327 = vmatmul.mubr.f32.gmra.mrb[0].mxu0 %v70
    %v328 = vpop.f32.mrb[0].mxu0
    %v329 = vadd.f32 %v53, %v328
    %v330 = vpop.f32.mrb[0].mxu0
    %v331 = vadd.f32 %v53, %v330
    %332 = vmatprep.mubr.f32.mxu0 0.0
    %333 = vmatmul.mubr.f32.gmra.mrb[0].mxu0 %v73
    %v334 = vpop.f32.mrb[0].mxu0
    %v335 = vadd.f32 %v58, %v334
    %v336 = vpop.f32.mrb[0].mxu0
    %v337 = vadd.f32 %v58, %v336
    %338 = vmatprep.mubr.f32.mxu0 0.0
    %339 = vmatmul.mubr.f32.gmra.mrb[0].mxu0 %v76
    %v340 = vpop.f32.mrb[0].mxu0
    %v341 = vadd.f32 %v63, %v340
    %v342 = vpop.f32.mrb[0].mxu0
    %v343 = vadd.f32 %v63, %v342
    %344 = vdwg.mxu0
    %345 = vmatprep.subr.mxu0 %v40
    %346 = vmatpush1.msra.mxu0 %v39
    %347 = vmatprep.subr.mxu0 0.0
    %348 = vmatpush1.msra.mxu0 0.0
    %349 = vmatprep.subr.mxu0 0.0
    %350 = vmatpush1.msra.mxu0 0.0
    %351 = vmatprep.subr.mxu0 0.0
    %352 = vmatpush1.msra.mxu0 0.0
    %353 = vmatprep.subr.mxu0 0.0
    %354 = vmatpush1.msra.mxu0 0.0
    %355 = vmatprep.subr.mxu0 0.0
    %356 = vmatpush1.msra.mxu0 0.0
    %357 = vmatprep.subr.mxu0 0.0
    %358 = vmatpush1.msra.mxu0 0.0
    %359 = vmatprep.subr.mxu0 0.0
    %360 = vmatpush1.msra.mxu0 0.0
    %361 = vmatprep.subr.mxu0 0.0
    %362 = vmatpush1.msra.mxu0 0.0
    %363 = vmatprep.subr.mxu0 0.0
    %364 = vmatpush1.msra.mxu0 0.0
    %365 = vmatprep.subr.mxu0 0.0
    %366 = vmatpush1.msra.mxu0 0.0
    %367 = vmatprep.subr.mxu0 0.0
    %368 = vmatpush1.msra.mxu0 0.0
    %369 = vmatprep.subr.mxu0 0.0
    %370 = vmatpush1.msra.mxu0 0.0
    %371 = vmatprep.subr.mxu0 0.0
    %372 = vmatpush1.msra.mxu0 0.0
    %373 = vmatprep.subr.mxu0 0.0
    %374 = vmatpush1.msra.mxu0 0.0
    %375 = vmatprep.subr.mxu0 0.0
    %376 = vmatpush1.msra.mxu0 0.0
    %377 = vmatprep.subr.mxu0 0.0
    %378 = vmatpush1.msra.mxu0 0.0
    %379 = vmatprep.subr.mxu0 0.0
    %380 = vmatpush1.msra.mxu0 0.0
    %381 = vmatprep.subr.mxu0 0.0
    %382 = vmatpush1.msra.mxu0 0.0
    %383 = vmatprep.subr.mxu0 0.0
    %384 = vmatpush1.msra.mxu0 0.0
    %385 = vmatprep.subr.mxu0 0.0
    %386 = vmatpush1.msra.mxu0 0.0
    %387 = vmatprep.subr.mxu0 0.0
    %388 = vmatpush1.msra.mxu0 0.0
    %389 = vmatprep.subr.mxu0 0.0
    %390 = vmatpush1.msra.mxu0 0.0
    %391 = vmatprep.subr.mxu0 0.0
    %392 = vmatpush1.msra.mxu0 0.0
    %393 = vmatprep.subr.mxu0 0.0
    %394 = vmatpush1.msra.mxu0 0.0
    %395 = vmatprep.subr.mxu0 0.0
    %396 = vmatpush1.msra.mxu0 0.0
    %397 = vmatprep.subr.mxu0 0.0
    %398 = vmatpush1.msra.mxu0 0.0
    %399 = vmatprep.subr.mxu0 0.0
    %400 = vmatpush1.msra.mxu0 0.0
    %401 = vmatprep.subr.mxu0 0.0
    %402 = vmatpush1.msra.mxu0 0.0
    %403 = vmatprep.subr.mxu0 0.0
    %404 = vmatpush1.msra.mxu0 0.0
    %405 = vmatprep.subr.mxu0 0.0
    %406 = vmatpush1.msra.mxu0 0.0
    %407 = vmatprep.subr.mxu0 0.0
    %408 = vmatpush1.msra.mxu0 0.0
    %409 = vmatprep.mubr.f32.mxu0 0.0
    %410 = vmatmul.mubr.f32.gmra.mrb[0].mxu0 %v67
    %v411 = vpop.f32.mrb[0].mxu0
    %v412 = vadd.f32 %v48, %v411
    %v413 = vpop.f32.mrb[0].mxu0
    %v414 = vadd.f32 %v48, %v413
    %415 = vmatprep.mubr.f32.mxu0 0.0
    %416 = vmatmul.mubr.f32.gmra.mrb[0].mxu0 %v70
    %v417 = vpop.f32.mrb[0].mxu0
    %v418 = vadd.f32 %v53, %v417
    %v419 = vpop.f32.mrb[0].mxu0
    %v420 = vadd.f32 %v53, %v419
    %421 = vmatprep.mubr.f32.mxu0 0.0
    %422 = vmatmul.mubr.f32.gmra.mrb[0].mxu0 %v73
    %v423 = vpop.f32.mrb[0].mxu0
    %v424 = vadd.f32 %v58, %v423
    %v425 = vpop.f32.mrb[0].mxu0
    %v426 = vadd.f32 %v58, %v425
    %427 = vmatprep.mubr.f32.mxu0 0.0
    %428 = vmatmul.mubr.f32.gmra.mrb[0].mxu0 %v76
    %v429 = vpop.f32.mrb[0].mxu0
    %v430 = vadd.f32 %v63, %v429
    %v431 = vpop.f32.mrb[0].mxu0
    %v432 = vadd.f32 %v63, %v431
    %433 = vdwg.mxu0
    %v434 = vtanh.pop %v145
    %v435 = vtanh.pop %v147
    %v436 = vtanh.pop %v234
    %v437 = vtanh.pop %v236
    %v438 = vtanh.pop %v323
    %v439 = vtanh.pop %v325
    %v440 = vtanh.pop %v412
    %v441 = vtanh.pop %v414
    %v442 = vtanh.pop %v151
    %v443 = vtanh.pop %v153
    %v444 = vtanh.pop %v240
    %v445 = vtanh.pop %v242
    %v446 = vtanh.pop %v329
    %v447 = vtanh.pop %v331
    %v448 = vtanh.pop %v418
    %v449 = vtanh.pop %v420
    %v450 = vtanh.pop %v157
    %v451 = vtanh.pop %v159
    %v452 = vtanh.pop %v246
    %v453 = vtanh.pop %v248
    %v454 = vtanh.pop %v335
    %v455 = vtanh.pop %v337
    %v456 = vtanh.pop %v424
    %v457 = vtanh.pop %v426
    %v458 = vtanh.pop %v163
    %v459 = vtanh.pop %v165
    %v460 = vtanh.pop %v252
    %v461 = vtanh.pop %v254
    %v462 = vtanh.pop %v341
    %v463 = vtanh.pop %v343
    %v464 = vtanh.pop %v430
    %v465 = vtanh.pop %v432
    %v466 = vld [vmem:[%s3] sm:$0xff]
    %v467 = vld [vmem:[%s3 + $0x8] sm:$0xff]
    %v468 = vld [vmem:[%s3 + $0x10] sm:$0xff]
    %v469 = vld [vmem:[%s3 + $0x18] sm:$0xff]
    %v470 = vld [vmem:[%s4] sm:$0xff]
    %v471 = vld [vmem:[%s4 + $0x8] sm:$0xff]
    %v472 = vld [vmem:[%s4 + $0x10] sm:$0xff]
    %v473 = vld [vmem:[%s4 + $0x18] sm:$0xff]
    %475 = vset.pattern.permute.xlu0 0
    %476 = vperm.xlu0 %475, %v470
    %v477 = vpop.permute.xlu0 %476
    %480 = vset.pattern.permute.xlu0 0
    %481 = vperm.xlu0 %480, %v471
    %v482 = vpop.permute.xlu0 %481
    %485 = vset.pattern.permute.xlu0 0
    %486 = vperm.xlu0 %485, %v472
    %v487 = vpop.permute.xlu0 %486
    %490 = vset.pattern.permute.xlu0 0
    %491 = vperm.xlu0 %490, %v473
    %v492 = vpop.permute.xlu0 %491
    %vm494 = vcmask 261120
    %v496 = vsel %vm494, %v466, 0
    %v499 = vsel %vm494, %v467, 0
    %v502 = vsel %vm494, %v468, 0
    %v505 = vsel %vm494, %v469, 0
    %507 = vmatprep.subr.mxu0 %v435
    %508 = vmatpush1.msra.mxu0 %v434
    %509 = vmatprep.subr.mxu0 %v443
    %510 = vmatpush1.msra.mxu0 %v442
    %511 = vmatprep.subr.mxu0 %v451
    %512 = vmatpush1.msra.mxu0 %v450
    %513 = vmatprep.subr.mxu0 %v459
    %514 = vmatpush1.msra.mxu0 %v458
    %515 = vmatprep.subr.mxu0 0.0
    %516 = vmatpush1.msra.mxu0 0.0
    %517 = vmatprep.subr.mxu0 0.0
    %518 = vmatpush1.msra.mxu0 0.0
    %519 = vmatprep.subr.mxu0 0.0
    %520 = vmatpush1.msra.mxu0 0.0
    %521 = vmatprep.subr.mxu0 0.0
    %522 = vmatpush1.msra.mxu0 0.0
    %523 = vmatprep.subr.mxu0 0.0
    %524 = vmatpush1.msra.mxu0 0.0
    %525 = vmatprep.subr.mxu0 0.0
    %526 = vmatpush1.msra.mxu0 0.0
    %527 = vmatprep.subr.mxu0 0.0
    %528 = vmatpush1.msra.mxu0 0.0
    %529 = vmatprep.subr.mxu0 0.0
    %530 = vmatpush1.msra.mxu0 0.0
    %531 = vmatprep.subr.mxu0 0.0
    %532 = vmatpush1.msra.mxu0 0.0
    %533 = vmatprep.subr.mxu0 0.0
    %534 = vmatpush1.msra.mxu0 0.0
    %535 = vmatprep.subr.mxu0 0.0
    %536 = vmatpush1.msra.mxu0 0.0
    %537 = vmatprep.subr.mxu0 0.0
    %538 = vmatpush1.msra.mxu0 0.0
    %539 = vmatprep.subr.mxu0 0.0
    %540 = vmatpush1.msra.mxu0 0.0
    %541 = vmatprep.subr.mxu0 0.0
    %542 = vmatpush1.msra.mxu0 0.0
    %543 = vmatprep.subr.mxu0 0.0
    %544 = vmatpush1.msra.mxu0 0.0
    %545 = vmatprep.subr.mxu0 0.0
    %546 = vmatpush1.msra.mxu0 0.0
    %547 = vmatprep.subr.mxu0 0.0
    %548 = vmatpush1.msra.mxu0 0.0
    %549 = vmatprep.subr.mxu0 0.0
    %550 = vmatpush1.msra.mxu0 0.0
    %551 = vmatprep.subr.mxu0 0.0
    %552 = vmatpush1.msra.mxu0 0.0
    %553 = vmatprep.subr.mxu0 0.0
    %554 = vmatpush1.msra.mxu0 0.0
    %555 = vmatprep.subr.mxu0 0.0
    %556 = vmatpush1.msra.mxu0 0.0
    %557 = vmatprep.subr.mxu0 0.0
    %558 = vmatpush1.msra.mxu0 0.0
    %559 = vmatprep.subr.mxu0 0.0
    %560 = vmatpush1.msra.mxu0 0.0
    %561 = vmatprep.subr.mxu0 0.0
    %562 = vmatpush1.msra.mxu0 0.0
    %563 = vmatprep.subr.mxu0 0.0
    %564 = vmatpush1.msra.mxu0 0.0
    %565 = vmatprep.subr.mxu0 0.0
    %566 = vmatpush1.msra.mxu0 0.0
    %567 = vmatprep.subr.mxu0 0.0
    %568 = vmatpush1.msra.mxu0 0.0
    %569 = vmatprep.subr.mxu0 0.0
    %570 = vmatpush1.msra.mxu0 0.0
    %571 = vmatprep.mubr.f32.mxu0 0.0
    %572 = vmatmul.mubr.f32.gmra.mrb[0].mxu0 %v496
    %v573 = vpop.f32.mrb[0].mxu0
    %v574 = vadd.f32 %v477, %v573
    %v575 = vpop.f32.mrb[0].mxu0
    %v576 = vadd.f32 %v477, %v575
    %577 = vmatprep.mubr.f32.mxu0 0.0
    %578 = vmatmul.mubr.f32.gmra.mrb[0].mxu0 %v499
    %v579 = vpop.f32.mrb[0].mxu0
    %v580 = vadd.f32 %v482, %v579
    %v581 = vpop.f32.mrb[0].mxu0
    %v582 = vadd.f32 %v482, %v581
    %583 = vmatprep.mubr.f32.mxu0 0.0
    %584 = vmatmul.mubr.f32.gmra.mrb[0].mxu0 %v502
    %v585 = vpop.f32.mrb[0].mxu0
    %v586 = vadd.f32 %v487, %v585
    %v587 = vpop.f32.mrb[0].mxu0
    %v588 = vadd.f32 %v487, %v587
    %589 = vmatprep.mubr.f32.mxu0 0.0
    %590 = vmatmul.mubr.f32.gmra.mrb[0].mxu0 %v505
    %v591 = vpop.f32.mrb[0].mxu0
    %v592 = vadd.f32 %v492, %v591
    %v593 = vpop.f32.mrb[0].mxu0
    %v594 = vadd.f32 %v492, %v593
    %595 = vdwg.mxu0
    %596 = vmatprep.subr.mxu0 %v437
    %597 = vmatpush1.msra.mxu0 %v436
    %598 = vmatprep.subr.mxu0 %v445
    %599 = vmatpush1.msra.mxu0 %v444
    %600 = vmatprep.subr.mxu0 %v453
    %601 = vmatpush1.msra.mxu0 %v452
    %602 = vmatprep.subr.mxu0 %v461
    %603 = vmatpush1.msra.mxu0 %v460
    %604 = vmatprep.subr.mxu0 0.0
    %605 = vmatpush1.msra.mxu0 0.0
    %606 = vmatprep.subr.mxu0 0.0
    %607 = vmatpush1.msra.mxu0 0.0
    %608 = vmatprep.subr.mxu0 0.0
    %609 = vmatpush1.msra.mxu0 0.0
    %610 = vmatprep.subr.mxu0 0.0
    %611 = vmatpush1.msra.mxu0 0.0
    %612 = vmatprep.subr.mxu0 0.0
    %613 = vmatpush1.msra.mxu0 0.0
    %614 = vmatprep.subr.mxu0 0.0
    %615 = vmatpush1.msra.mxu0 0.0
    %616 = vmatprep.subr.mxu0 0.0
    %617 = vmatpush1.msra.mxu0 0.0
    %618 = vmatprep.subr.mxu0 0.0
    %619 = vmatpush1.msra.mxu0 0.0
    %620 = vmatprep.subr.mxu0 0.0
    %621 = vmatpush1.msra.mxu0 0.0
    %622 = vmatprep.subr.mxu0 0.0
    %623 = vmatpush1.msra.mxu0 0.0
    %624 = vmatprep.subr.mxu0 0.0
    %625 = vmatpush1.msra.mxu0 0.0
    %626 = vmatprep.subr.mxu0 0.0
    %627 = vmatpush1.msra.mxu0 0.0
    %628 = vmatprep.subr.mxu0 0.0
    %629 = vmatpush1.msra.mxu0 0.0
    %630 = vmatprep.subr.mxu0 0.0
    %631 = vmatpush1.msra.mxu0 0.0
    %632 = vmatprep.subr.mxu0 0.0
    %633 = vmatpush1.msra.mxu0 0.0
    %634 = vmatprep.subr.mxu0 0.0
    %635 = vmatpush1.msra.mxu0 0.0
    %636 = vmatprep.subr.mxu0 0.0
    %637 = vmatpush1.msra.mxu0 0.0
    %638 = vmatprep.subr.mxu0 0.0
    %639 = vmatpush1.msra.mxu0 0.0
    %640 = vmatprep.subr.mxu0 0.0
    %641 = vmatpush1.msra.mxu0 0.0
    %642 = vmatprep.subr.mxu0 0.0
    %643 = vmatpush1.msra.mxu0 0.0
    %644 = vmatprep.subr.mxu0 0.0
    %645 = vmatpush1.msra.mxu0 0.0
    %646 = vmatprep.subr.mxu0 0.0
    %647 = vmatpush1.msra.mxu0 0.0
    %648 = vmatprep.subr.mxu0 0.0
    %649 = vmatpush1.msra.mxu0 0.0
    %650 = vmatprep.subr.mxu0 0.0
    %651 = vmatpush1.msra.mxu0 0.0
    %652 = vmatprep.subr.mxu0 0.0
    %653 = vmatpush1.msra.mxu0 0.0
    %654 = vmatprep.subr.mxu0 0.0
    %655 = vmatpush1.msra.mxu0 0.0
    %656 = vmatprep.subr.mxu0 0.0
    %657 = vmatpush1.msra.mxu0 0.0
    %658 = vmatprep.subr.mxu0 0.0
    %659 = vmatpush1.msra.mxu0 0.0
    %660 = vmatprep.mubr.f32.mxu0 0.0
    %661 = vmatmul.mubr.f32.gmra.mrb[0].mxu0 %v496
    %v662 = vpop.f32.mrb[0].mxu0
    %v663 = vadd.f32 %v477, %v662
    %v664 = vpop.f32.mrb[0].mxu0
    %v665 = vadd.f32 %v477, %v664
    %666 = vmatprep.mubr.f32.mxu0 0.0
    %667 = vmatmul.mubr.f32.gmra.mrb[0].mxu0 %v499
    %v668 = vpop.f32.mrb[0].mxu0
    %v669 = vadd.f32 %v482, %v668
    %v670 = vpop.f32.mrb[0].mxu0
    %v671 = vadd.f32 %v482, %v670
    %672 = vmatprep.mubr.f32.mxu0 0.0
    %673 = vmatmul.mubr.f32.gmra.mrb[0].mxu0 %v502
    %v674 = vpop.f32.mrb[0].mxu0
    %v675 = vadd.f32 %v487, %v674
    %v676 = vpop.f32.mrb[0].mxu0
    %v677 = vadd.f32 %v487, %v676
    %678 = vmatprep.mubr.f32.mxu0 0.0
    %679 = vmatmul.mubr.f32.gmra.mrb[0].mxu0 %v505
    %v680 = vpop.f32.mrb[0].mxu0
    %v681 = vadd.f32 %v492, %v680
    %v682 = vpop.f32.mrb[0].mxu0
    %v683 = vadd.f32 %v492, %v682
    %684 = vdwg.mxu0
    %685 = vmatprep.subr.mxu0 %v439
    %686 = vmatpush1.msra.mxu0 %v438
    %687 = vmatprep.subr.mxu0 %v447
    %688 = vmatpush1.msra.mxu0 %v446
    %689 = vmatprep.subr.mxu0 %v455
    %690 = vmatpush1.msra.mxu0 %v454
    %691 = vmatprep.subr.mxu0 %v463
    %692 = vmatpush1.msra.mxu0 %v462
    %693 = vmatprep.subr.mxu0 0.0
    %694 = vmatpush1.msra.mxu0 0.0
    %695 = vmatprep.subr.mxu0 0.0
    %696 = vmatpush1.msra.mxu0 0.0
    %697 = vmatprep.subr.mxu0 0.0
    %698 = vmatpush1.msra.mxu0 0.0
    %699 = vmatprep.subr.mxu0 0.0
    %700 = vmatpush1.msra.mxu0 0.0
    %701 = vmatprep.subr.mxu0 0.0
    %702 = vmatpush1.msra.mxu0 0.0
    %703 = vmatprep.subr.mxu0 0.0
    %704 = vmatpush1.msra.mxu0 0.0
    %705 = vmatprep.subr.mxu0 0.0
    %706 = vmatpush1.msra.mxu0 0.0
    %707 = vmatprep.subr.mxu0 0.0
    %708 = vmatpush1.msra.mxu0 0.0
    %709 = vmatprep.subr.mxu0 0.0
    %710 = vmatpush1.msra.mxu0 0.0
    %711 = vmatprep.subr.mxu0 0.0
    %712 = vmatpush1.msra.mxu0 0.0
    %713 = vmatprep.subr.mxu0 0.0
    %714 = vmatpush1.msra.mxu0 0.0
    %715 = vmatprep.subr.mxu0 0.0
    %716 = vmatpush1.msra.mxu0 0.0
    %717 = vmatprep.subr.mxu0 0.0
    %718 = vmatpush1.msra.mxu0 0.0
    %719 = vmatprep.subr.mxu0 0.0
    %720 = vmatpush1.msra.mxu0 0.0
    %721 = vmatprep.subr.mxu0 0.0
    %722 = vmatpush1.msra.mxu0 0.0
    %723 = vmatprep.subr.mxu0 0.0
    %724 = vmatpush1.msra.mxu0 0.0
    %725 = vmatprep.subr.mxu0 0.0
    %726 = vmatpush1.msra.mxu0 0.0
    %727 = vmatprep.subr.mxu0 0.0
    %728 = vmatpush1.msra.mxu0 0.0
    %729 = vmatprep.subr.mxu0 0.0
    %730 = vmatpush1.msra.mxu0 0.0
    %731 = vmatprep.subr.mxu0 0.0
    %732 = vmatpush1.msra.mxu0 0.0
    %733 = vmatprep.subr.mxu0 0.0
    %734 = vmatpush1.msra.mxu0 0.0
    %735 = vmatprep.subr.mxu0 0.0
    %736 = vmatpush1.msra.mxu0 0.0
    %737 = vmatprep.subr.mxu0 0.0
    %738 = vmatpush1.msra.mxu0 0.0
    %739 = vmatprep.subr.mxu0 0.0
    %740 = vmatpush1.msra.mxu0 0.0
    %741 = vmatprep.subr.mxu0 0.0
    %742 = vmatpush1.msra.mxu0 0.0
    %743 = vmatprep.subr.mxu0 0.0
    %744 = vmatpush1.msra.mxu0 0.0
    %745 = vmatprep.subr.mxu0 0.0
    %746 = vmatpush1.msra.mxu0 0.0
    %747 = vmatprep.subr.mxu0 0.0
    %748 = vmatpush1.msra.mxu0 0.0
    %749 = vmatprep.mubr.f32.mxu0 0.0
    %750 = vmatmul.mubr.f32.gmra.mrb[0].mxu0 %v496
    %v751 = vpop.f32.mrb[0].mxu0
    %v752 = vadd.f32 %v477, %v751
    %v753 = vpop.f32.mrb[0].mxu0
    %v754 = vadd.f32 %v477, %v753
    %755 = vmatprep.mubr.f32.mxu0 0.0
    %756 = vmatmul.mubr.f32.gmra.mrb[0].mxu0 %v499
    %v757 = vpop.f32.mrb[0].mxu0
    %v758 = vadd.f32 %v482, %v757
    %v759 = vpop.f32.mrb[0].mxu0
    %v760 = vadd.f32 %v482, %v759
    %761 = vmatprep.mubr.f32.mxu0 0.0
    %762 = vmatmul.mubr.f32.gmra.mrb[0].mxu0 %v502
    %v763 = vpop.f32.mrb[0].mxu0
    %v764 = vadd.f32 %v487, %v763
    %v765 = vpop.f32.mrb[0].mxu0
    %v766 = vadd.f32 %v487, %v765
    %767 = vmatprep.mubr.f32.mxu0 0.0
    %768 = vmatmul.mubr.f32.gmra.mrb[0].mxu0 %v505
    %v769 = vpop.f32.mrb[0].mxu0
    %v770 = vadd.f32 %v492, %v769
    %v771 = vpop.f32.mrb[0].mxu0
    %v772 = vadd.f32 %v492, %v771
    %773 = vdwg.mxu0
    %774 = vmatprep.subr.mxu0 %v441
    %775 = vmatpush1.msra.mxu0 %v440
    %776 = vmatprep.subr.mxu0 %v449
    %777 = vmatpush1.msra.mxu0 %v448
    %778 = vmatprep.subr.mxu0 %v457
    %779 = vmatpush1.msra.mxu0 %v456
    %780 = vmatprep.subr.mxu0 %v465
    %781 = vmatpush1.msra.mxu0 %v464
    %782 = vmatprep.subr.mxu0 0.0
    %783 = vmatpush1.msra.mxu0 0.0
    %784 = vmatprep.subr.mxu0 0.0
    %785 = vmatpush1.msra.mxu0 0.0
    %786 = vmatprep.subr.mxu0 0.0
    %787 = vmatpush1.msra.mxu0 0.0
    %788 = vmatprep.subr.mxu0 0.0
    %789 = vmatpush1.msra.mxu0 0.0
    %790 = vmatprep.subr.mxu0 0.0
    %791 = vmatpush1.msra.mxu0 0.0
    %792 = vmatprep.subr.mxu0 0.0
    %793 = vmatpush1.msra.mxu0 0.0
    %794 = vmatprep.subr.mxu0 0.0
    %795 = vmatpush1.msra.mxu0 0.0
    %796 = vmatprep.subr.mxu0 0.0
    %797 = vmatpush1.msra.mxu0 0.0
    %798 = vmatprep.subr.mxu0 0.0
    %799 = vmatpush1.msra.mxu0 0.0
    %800 = vmatprep.subr.mxu0 0.0
    %801 = vmatpush1.msra.mxu0 0.0
    %802 = vmatprep.subr.mxu0 0.0
    %803 = vmatpush1.msra.mxu0 0.0
    %804 = vmatprep.subr.mxu0 0.0
    %805 = vmatpush1.msra.mxu0 0.0
    %806 = vmatprep.subr.mxu0 0.0
    %807 = vmatpush1.msra.mxu0 0.0
    %808 = vmatprep.subr.mxu0 0.0
    %809 = vmatpush1.msra.mxu0 0.0
    %810 = vmatprep.subr.mxu0 0.0
    %811 = vmatpush1.msra.mxu0 0.0
    %812 = vmatprep.subr.mxu0 0.0
    %813 = vmatpush1.msra.mxu0 0.0
    %814 = vmatprep.subr.mxu0 0.0
    %815 = vmatpush1.msra.mxu0 0.0
    %816 = vmatprep.subr.mxu0 0.0
    %817 = vmatpush1.msra.mxu0 0.0
    %818 = vmatprep.subr.mxu0 0.0
    %819 = vmatpush1.msra.mxu0 0.0
    %820 = vmatprep.subr.mxu0 0.0
    %821 = vmatpush1.msra.mxu0 0.0
    %822 = vmatprep.subr.mxu0 0.0
    %823 = vmatpush1.msra.mxu0 0.0
    %824 = vmatprep.subr.mxu0 0.0
    %825 = vmatpush1.msra.mxu0 0.0
    %826 = vmatprep.subr.mxu0 0.0
    %827 = vmatpush1.msra.mxu0 0.0
    %828 = vmatprep.subr.mxu0 0.0
    %829 = vmatpush1.msra.mxu0 0.0
    %830 = vmatprep.subr.mxu0 0.0
    %831 = vmatpush1.msra.mxu0 0.0
    %832 = vmatprep.subr.mxu0 0.0
    %833 = vmatpush1.msra.mxu0 0.0
    %834 = vmatprep.subr.mxu0 0.0
    %835 = vmatpush1.msra.mxu0 0.0
    %836 = vmatprep.subr.mxu0 0.0
    %837 = vmatpush1.msra.mxu0 0.0
    %838 = vmatprep.mubr.f32.mxu0 0.0
    %839 = vmatmul.mubr.f32.gmra.mrb[0].mxu0 %v496
    %v840 = vpop.f32.mrb[0].mxu0
    %v841 = vadd.f32 %v477, %v840
    %v842 = vpop.f32.mrb[0].mxu0
    %v843 = vadd.f32 %v477, %v842
    %844 = vmatprep.mubr.f32.mxu0 0.0
    %845 = vmatmul.mubr.f32.gmra.mrb[0].mxu0 %v499
    %v846 = vpop.f32.mrb[0].mxu0
    %v847 = vadd.f32 %v482, %v846
    %v848 = vpop.f32.mrb[0].mxu0
    %v849 = vadd.f32 %v482, %v848
    %850 = vmatprep.mubr.f32.mxu0 0.0
    %851 = vmatmul.mubr.f32.gmra.mrb[0].mxu0 %v502
    %v852 = vpop.f32.mrb[0].mxu0
    %v853 = vadd.f32 %v487, %v852
    %v854 = vpop.f32.mrb[0].mxu0
    %v855 = vadd.f32 %v487, %v854
    %856 = vmatprep.mubr.f32.mxu0 0.0
    %857 = vmatmul.mubr.f32.gmra.mrb[0].mxu0 %v505
    %v858 = vpop.f32.mrb[0].mxu0
    %v859 = vadd.f32 %v492, %v858
    %v860 = vpop.f32.mrb[0].mxu0
    %v861 = vadd.f32 %v492, %v860
    %862 = vdwg.mxu0
    %v863 = vtanh.pop %v574
    %v864 = vtanh.pop %v576
    %v865 = vtanh.pop %v663
    %v866 = vtanh.pop %v665
    %v867 = vtanh.pop %v752
    %v868 = vtanh.pop %v754
    %v869 = vtanh.pop %v841
    %v870 = vtanh.pop %v843
    %v871 = vtanh.pop %v580
    %v872 = vtanh.pop %v582
    %v873 = vtanh.pop %v669
    %v874 = vtanh.pop %v671
    %v875 = vtanh.pop %v758
    %v876 = vtanh.pop %v760
    %v877 = vtanh.pop %v847
    %v878 = vtanh.pop %v849
    %v879 = vtanh.pop %v586
    %v880 = vtanh.pop %v588
    %v881 = vtanh.pop %v675
    %v882 = vtanh.pop %v677
    %v883 = vtanh.pop %v764
    %v884 = vtanh.pop %v766
    %v885 = vtanh.pop %v853
    %v886 = vtanh.pop %v855
    %v887 = vtanh.pop %v592
    %v888 = vtanh.pop %v594
    %v889 = vtanh.pop %v681
    %v890 = vtanh.pop %v683
    %v891 = vtanh.pop %v770
    %v892 = vtanh.pop %v772
    %v893 = vtanh.pop %v859
    %v894 = vtanh.pop %v861
    %s895 = scalar_lea.vmem %s3, 32
    %v896 = vld [vmem:[%s895] sm:$0xff]
    %v897 = vld [vmem:[%s895 + $0x8] sm:$0xff]
    %v898 = vld [vmem:[%s895 + $0x10] sm:$0xff]
    %v899 = vld [vmem:[%s895 + $0x18] sm:$0xff]
    %s900 = scalar_lea.vmem %s4, 32
    %v901 = vld [vmem:[%s900] sm:$0xff]
    %v902 = vld [vmem:[%s900 + $0x8] sm:$0xff]
    %v903 = vld [vmem:[%s900 + $0x10] sm:$0xff]
    %v904 = vld [vmem:[%s900 + $0x18] sm:$0xff]
    %906 = vset.pattern.permute.xlu0 0
    %907 = vperm.xlu0 %906, %v901
    %v908 = vpop.permute.xlu0 %907
    %911 = vset.pattern.permute.xlu0 0
    %912 = vperm.xlu0 %911, %v902
    %v913 = vpop.permute.xlu0 %912
    %916 = vset.pattern.permute.xlu0 0
    %917 = vperm.xlu0 %916, %v903
    %v918 = vpop.permute.xlu0 %917
    %921 = vset.pattern.permute.xlu0 0
    %922 = vperm.xlu0 %921, %v904
    %v923 = vpop.permute.xlu0 %922
    %v926 = vsel %vm494, %v896, 0
    %v929 = vsel %vm494, %v897, 0
    %v932 = vsel %vm494, %v898, 0
    %v935 = vsel %vm494, %v899, 0
    %937 = vmatprep.subr.mxu0 %v864
    %938 = vmatpush1.msra.mxu0 %v863
    %939 = vmatprep.subr.mxu0 %v872
    %940 = vmatpush1.msra.mxu0 %v871
    %941 = vmatprep.subr.mxu0 %v880
    %942 = vmatpush1.msra.mxu0 %v879
    %943 = vmatprep.subr.mxu0 %v888
    %944 = vmatpush1.msra.mxu0 %v887
    %945 = vmatprep.subr.mxu0 0.0
    %946 = vmatpush1.msra.mxu0 0.0
    %947 = vmatprep.subr.mxu0 0.0
    %948 = vmatpush1.msra.mxu0 0.0
    %949 = vmatprep.subr.mxu0 0.0
    %950 = vmatpush1.msra.mxu0 0.0
    %951 = vmatprep.subr.mxu0 0.0
    %952 = vmatpush1.msra.mxu0 0.0
    %953 = vmatprep.subr.mxu0 0.0
    %954 = vmatpush1.msra.mxu0 0.0
    %955 = vmatprep.subr.mxu0 0.0
    %956 = vmatpush1.msra.mxu0 0.0
    %957 = vmatprep.subr.mxu0 0.0
    %958 = vmatpush1.msra.mxu0 0.0
    %959 = vmatprep.subr.mxu0 0.0
    %960 = vmatpush1.msra.mxu0 0.0
    %961 = vmatprep.subr.mxu0 0.0
    %962 = vmatpush1.msra.mxu0 0.0
    %963 = vmatprep.subr.mxu0 0.0
    %964 = vmatpush1.msra.mxu0 0.0
    %965 = vmatprep.subr.mxu0 0.0
    %966 = vmatpush1.msra.mxu0 0.0
    %967 = vmatprep.subr.mxu0 0.0
    %968 = vmatpush1.msra.mxu0 0.0
    %969 = vmatprep.subr.mxu0 0.0
    %970 = vmatpush1.msra.mxu0 0.0
    %971 = vmatprep.subr.mxu0 0.0
    %972 = vmatpush1.msra.mxu0 0.0
    %973 = vmatprep.subr.mxu0 0.0
    %974 = vmatpush1.msra.mxu0 0.0
    %975 = vmatprep.subr.mxu0 0.0
    %976 = vmatpush1.msra.mxu0 0.0
    %977 = vmatprep.subr.mxu0 0.0
    %978 = vmatpush1.msra.mxu0 0.0
    %979 = vmatprep.subr.mxu0 0.0
    %980 = vmatpush1.msra.mxu0 0.0
    %981 = vmatprep.subr.mxu0 0.0
    %982 = vmatpush1.msra.mxu0 0.0
    %983 = vmatprep.subr.mxu0 0.0
    %984 = vmatpush1.msra.mxu0 0.0
    %985 = vmatprep.subr.mxu0 0.0
    %986 = vmatpush1.msra.mxu0 0.0
    %987 = vmatprep.subr.mxu0 0.0
    %988 = vmatpush1.msra.mxu0 0.0
    %989 = vmatprep.subr.mxu0 0.0
    %990 = vmatpush1.msra.mxu0 0.0
    %991 = vmatprep.subr.mxu0 0.0
    %992 = vmatpush1.msra.mxu0 0.0
    %993 = vmatprep.subr.mxu0 0.0
    %994 = vmatpush1.msra.mxu0 0.0
    %995 = vmatprep.subr.mxu0 0.0
    %996 = vmatpush1.msra.mxu0 0.0
    %997 = vmatprep.subr.mxu0 0.0
    %998 = vmatpush1.msra.mxu0 0.0
    %999 = vmatprep.subr.mxu0 0.0
    %1000 = vmatpush1.msra.mxu0 0.0
    %1001 = vmatprep.mubr.f32.mxu0 0.0
    %1002 = vmatmul.mubr.f32.gmra.mrb[0].mxu0 %v926
    %v1003 = vpop.f32.mrb[0].mxu0
    %v1004 = vadd.f32 %v908, %v1003
    %v1005 = vpop.f32.mrb[0].mxu0
    %v1006 = vadd.f32 %v908, %v1005
    %1007 = vmatprep.mubr.f32.mxu0 0.0
    %1008 = vmatmul.mubr.f32.gmra.mrb[0].mxu0 %v929
    %v1009 = vpop.f32.mrb[0].mxu0
    %v1010 = vadd.f32 %v913, %v1009
    %v1011 = vpop.f32.mrb[0].mxu0
    %v1012 = vadd.f32 %v913, %v1011
    %1013 = vmatprep.mubr.f32.mxu0 0.0
    %1014 = vmatmul.mubr.f32.gmra.mrb[0].mxu0 %v932
    %v1015 = vpop.f32.mrb[0].mxu0
    %v1016 = vadd.f32 %v918, %v1015
    %v1017 = vpop.f32.mrb[0].mxu0
    %v1018 = vadd.f32 %v918, %v1017
    %1019 = vmatprep.mubr.f32.mxu0 0.0
    %1020 = vmatmul.mubr.f32.gmra.mrb[0].mxu0 %v935
    %v1021 = vpop.f32.mrb[0].mxu0
    %v1022 = vadd.f32 %v923, %v1021
    %v1023 = vpop.f32.mrb[0].mxu0
    %v1024 = vadd.f32 %v923, %v1023
    %1025 = vdwg.mxu0
    %1026 = vmatprep.subr.mxu0 %v866
    %1027 = vmatpush1.msra.mxu0 %v865
    %1028 = vmatprep.subr.mxu0 %v874
    %1029 = vmatpush1.msra.mxu0 %v873
    %1030 = vmatprep.subr.mxu0 %v882
    %1031 = vmatpush1.msra.mxu0 %v881
    %1032 = vmatprep.subr.mxu0 %v890
    %1033 = vmatpush1.msra.mxu0 %v889
    %1034 = vmatprep.subr.mxu0 0.0
    %1035 = vmatpush1.msra.mxu0 0.0
    %1036 = vmatprep.subr.mxu0 0.0
    %1037 = vmatpush1.msra.mxu0 0.0
    %1038 = vmatprep.subr.mxu0 0.0
    %1039 = vmatpush1.msra.mxu0 0.0
    %1040 = vmatprep.subr.mxu0 0.0
    %1041 = vmatpush1.msra.mxu0 0.0
    %1042 = vmatprep.subr.mxu0 0.0
    %1043 = vmatpush1.msra.mxu0 0.0
    %1044 = vmatprep.subr.mxu0 0.0
    %1045 = vmatpush1.msra.mxu0 0.0
    %1046 = vmatprep.subr.mxu0 0.0
    %1047 = vmatpush1.msra.mxu0 0.0
    %1048 = vmatprep.subr.mxu0 0.0
    %1049 = vmatpush1.msra.mxu0 0.0
    %1050 = vmatprep.subr.mxu0 0.0
    %1051 = vmatpush1.msra.mxu0 0.0
    %1052 = vmatprep.subr.mxu0 0.0
    %1053 = vmatpush1.msra.mxu0 0.0
    %1054 = vmatprep.subr.mxu0 0.0
    %1055 = vmatpush1.msra.mxu0 0.0
    %1056 = vmatprep.subr.mxu0 0.0
    %1057 = vmatpush1.msra.mxu0 0.0
    %1058 = vmatprep.subr.mxu0 0.0
    %1059 = vmatpush1.msra.mxu0 0.0
    %1060 = vmatprep.subr.mxu0 0.0
    %1061 = vmatpush1.msra.mxu0 0.0
    %1062 = vmatprep.subr.mxu0 0.0
    %1063 = vmatpush1.msra.mxu0 0.0
    %1064 = vmatprep.subr.mxu0 0.0
    %1065 = vmatpush1.msra.mxu0 0.0
    %1066 = vmatprep.subr.mxu0 0.0
    %1067 = vmatpush1.msra.mxu0 0.0
    %1068 = vmatprep.subr.mxu0 0.0
    %1069 = vmatpush1.msra.mxu0 0.0
    %1070 = vmatprep.subr.mxu0 0.0
    %1071 = vmatpush1.msra.mxu0 0.0
    %1072 = vmatprep.subr.mxu0 0.0
    %1073 = vmatpush1.msra.mxu0 0.0
    %1074 = vmatprep.subr.mxu0 0.0
    %1075 = vmatpush1.msra.mxu0 0.0
    %1076 = vmatprep.subr.mxu0 0.0
    %1077 = vmatpush1.msra.mxu0 0.0
    %1078 = vmatprep.subr.mxu0 0.0
    %1079 = vmatpush1.msra.mxu0 0.0
    %1080 = vmatprep.subr.mxu0 0.0
    %1081 = vmatpush1.msra.mxu0 0.0
    %1082 = vmatprep.subr.mxu0 0.0
    %1083 = vmatpush1.msra.mxu0 0.0
    %1084 = vmatprep.subr.mxu0 0.0
    %1085 = vmatpush1.msra.mxu0 0.0
    %1086 = vmatprep.subr.mxu0 0.0
    %1087 = vmatpush1.msra.mxu0 0.0
    %1088 = vmatprep.subr.mxu0 0.0
    %1089 = vmatpush1.msra.mxu0 0.0
    %1090 = vmatprep.mubr.f32.mxu0 0.0
    %1091 = vmatmul.mubr.f32.gmra.mrb[0].mxu0 %v926
    %v1092 = vpop.f32.mrb[0].mxu0
    %v1093 = vadd.f32 %v908, %v1092
    %v1094 = vpop.f32.mrb[0].mxu0
    %v1095 = vadd.f32 %v908, %v1094
    %1096 = vmatprep.mubr.f32.mxu0 0.0
    %1097 = vmatmul.mubr.f32.gmra.mrb[0].mxu0 %v929
    %v1098 = vpop.f32.mrb[0].mxu0
    %v1099 = vadd.f32 %v913, %v1098
    %v1100 = vpop.f32.mrb[0].mxu0
    %v1101 = vadd.f32 %v913, %v1100
    %1102 = vmatprep.mubr.f32.mxu0 0.0
    %1103 = vmatmul.mubr.f32.gmra.mrb[0].mxu0 %v932
    %v1104 = vpop.f32.mrb[0].mxu0
    %v1105 = vadd.f32 %v918, %v1104
    %v1106 = vpop.f32.mrb[0].mxu0
    %v1107 = vadd.f32 %v918, %v1106
    %1108 = vmatprep.mubr.f32.mxu0 0.0
    %1109 = vmatmul.mubr.f32.gmra.mrb[0].mxu0 %v935
    %v1110 = vpop.f32.mrb[0].mxu0
    %v1111 = vadd.f32 %v923, %v1110
    %v1112 = vpop.f32.mrb[0].mxu0
    %v1113 = vadd.f32 %v923, %v1112
    %1114 = vdwg.mxu0
    %1115 = vmatprep.subr.mxu0 %v868
    %1116 = vmatpush1.msra.mxu0 %v867
    %1117 = vmatprep.subr.mxu0 %v876
    %1118 = vmatpush1.msra.mxu0 %v875
    %1119 = vmatprep.subr.mxu0 %v884
    %1120 = vmatpush1.msra.mxu0 %v883
    %1121 = vmatprep.subr.mxu0 %v892
    %1122 = vmatpush1.msra.mxu0 %v891
    %1123 = vmatprep.subr.mxu0 0.0
    %1124 = vmatpush1.msra.mxu0 0.0
    %1125 = vmatprep.subr.mxu0 0.0
    %1126 = vmatpush1.msra.mxu0 0.0
    %1127 = vmatprep.subr.mxu0 0.0
    %1128 = vmatpush1.msra.mxu0 0.0
    %1129 = vmatprep.subr.mxu0 0.0
    %1130 = vmatpush1.msra.mxu0 0.0
    %1131 = vmatprep.subr.mxu0 0.0
    %1132 = vmatpush1.msra.mxu0 0.0
    %1133 = vmatprep.subr.mxu0 0.0
    %1134 = vmatpush1.msra.mxu0 0.0
    %1135 = vmatprep.subr.mxu0 0.0
    %1136 = vmatpush1.msra.mxu0 0.0
    %1137 = vmatprep.subr.mxu0 0.0
    %1138 = vmatpush1.msra.mxu0 0.0
    %1139 = vmatprep.subr.mxu0 0.0
    %1140 = vmatpush1.msra.mxu0 0.0
    %1141 = vmatprep.subr.mxu0 0.0
    %1142 = vmatpush1.msra.mxu0 0.0
    %1143 = vmatprep.subr.mxu0 0.0
    %1144 = vmatpush1.msra.mxu0 0.0
    %1145 = vmatprep.subr.mxu0 0.0
    %1146 = vmatpush1.msra.mxu0 0.0
    %1147 = vmatprep.subr.mxu0 0.0
    %1148 = vmatpush1.msra.mxu0 0.0
    %1149 = vmatprep.subr.mxu0 0.0
    %1150 = vmatpush1.msra.mxu0 0.0
    %1151 = vmatprep.subr.mxu0 0.0
    %1152 = vmatpush1.msra.mxu0 0.0
    %1153 = vmatprep.subr.mxu0 0.0
    %1154 = vmatpush1.msra.mxu0 0.0
    %1155 = vmatprep.subr.mxu0 0.0
    %1156 = vmatpush1.msra.mxu0 0.0
    %1157 = vmatprep.subr.mxu0 0.0
    %1158 = vmatpush1.msra.mxu0 0.0
    %1159 = vmatprep.subr.mxu0 0.0
    %1160 = vmatpush1.msra.mxu0 0.0
    %1161 = vmatprep.subr.mxu0 0.0
    %1162 = vmatpush1.msra.mxu0 0.0
    %1163 = vmatprep.subr.mxu0 0.0
    %1164 = vmatpush1.msra.mxu0 0.0
    %1165 = vmatprep.subr.mxu0 0.0
    %1166 = vmatpush1.msra.mxu0 0.0
    %1167 = vmatprep.subr.mxu0 0.0
    %1168 = vmatpush1.msra.mxu0 0.0
    %1169 = vmatprep.subr.mxu0 0.0
    %1170 = vmatpush1.msra.mxu0 0.0
    %1171 = vmatprep.subr.mxu0 0.0
    %1172 = vmatpush1.msra.mxu0 0.0
    %1173 = vmatprep.subr.mxu0 0.0
    %1174 = vmatpush1.msra.mxu0 0.0
    %1175 = vmatprep.subr.mxu0 0.0
    %1176 = vmatpush1.msra.mxu0 0.0
    %1177 = vmatprep.subr.mxu0 0.0
    %1178 = vmatpush1.msra.mxu0 0.0
    %1179 = vmatprep.mubr.f32.mxu0 0.0
    %1180 = vmatmul.mubr.f32.gmra.mrb[0].mxu0 %v926
    %v1181 = vpop.f32.mrb[0].mxu0
    %v1182 = vadd.f32 %v908, %v1181
    %v1183 = vpop.f32.mrb[0].mxu0
    %v1184 = vadd.f32 %v908, %v1183
    %1185 = vmatprep.mubr.f32.mxu0 0.0
    %1186 = vmatmul.mubr.f32.gmra.mrb[0].mxu0 %v929
    %v1187 = vpop.f32.mrb[0].mxu0
    %v1188 = vadd.f32 %v913, %v1187
    %v1189 = vpop.f32.mrb[0].mxu0
    %v1190 = vadd.f32 %v913, %v1189
    %1191 = vmatprep.mubr.f32.mxu0 0.0
    %1192 = vmatmul.mubr.f32.gmra.mrb[0].mxu0 %v932
    %v1193 = vpop.f32.mrb[0].mxu0
    %v1194 = vadd.f32 %v918, %v1193
    %v1195 = vpop.f32.mrb[0].mxu0
    %v1196 = vadd.f32 %v918, %v1195
    %1197 = vmatprep.mubr.f32.mxu0 0.0
    %1198 = vmatmul.mubr.f32.gmra.mrb[0].mxu0 %v935
    %v1199 = vpop.f32.mrb[0].mxu0
    %v1200 = vadd.f32 %v923, %v1199
    %v1201 = vpop.f32.mrb[0].mxu0
    %v1202 = vadd.f32 %v923, %v1201
    %1203 = vdwg.mxu0
    %1204 = vmatprep.subr.mxu0 %v870
    %1205 = vmatpush1.msra.mxu0 %v869
    %1206 = vmatprep.subr.mxu0 %v878
    %1207 = vmatpush1.msra.mxu0 %v877
    %1208 = vmatprep.subr.mxu0 %v886
    %1209 = vmatpush1.msra.mxu0 %v885
    %1210 = vmatprep.subr.mxu0 %v894
    %1211 = vmatpush1.msra.mxu0 %v893
    %1212 = vmatprep.subr.mxu0 0.0
    %1213 = vmatpush1.msra.mxu0 0.0
    %1214 = vmatprep.subr.mxu0 0.0
    %1215 = vmatpush1.msra.mxu0 0.0
    %1216 = vmatprep.subr.mxu0 0.0
    %1217 = vmatpush1.msra.mxu0 0.0
    %1218 = vmatprep.subr.mxu0 0.0
    %1219 = vmatpush1.msra.mxu0 0.0
    %1220 = vmatprep.subr.mxu0 0.0
    %1221 = vmatpush1.msra.mxu0 0.0
    %1222 = vmatprep.subr.mxu0 0.0
    %1223 = vmatpush1.msra.mxu0 0.0
    %1224 = vmatprep.subr.mxu0 0.0
    %1225 = vmatpush1.msra.mxu0 0.0
    %1226 = vmatprep.subr.mxu0 0.0
    %1227 = vmatpush1.msra.mxu0 0.0
    %1228 = vmatprep.subr.mxu0 0.0
    %1229 = vmatpush1.msra.mxu0 0.0
    %1230 = vmatprep.subr.mxu0 0.0
    %1231 = vmatpush1.msra.mxu0 0.0
    %1232 = vmatprep.subr.mxu0 0.0
    %1233 = vmatpush1.msra.mxu0 0.0
    %1234 = vmatprep.subr.mxu0 0.0
    %1235 = vmatpush1.msra.mxu0 0.0
    %1236 = vmatprep.subr.mxu0 0.0
    %1237 = vmatpush1.msra.mxu0 0.0
    %1238 = vmatprep.subr.mxu0 0.0
    %1239 = vmatpush1.msra.mxu0 0.0
    %1240 = vmatprep.subr.mxu0 0.0
    %1241 = vmatpush1.msra.mxu0 0.0
    %1242 = vmatprep.subr.mxu0 0.0
    %1243 = vmatpush1.msra.mxu0 0.0
    %1244 = vmatprep.subr.mxu0 0.0
    %1245 = vmatpush1.msra.mxu0 0.0
    %1246 = vmatprep.subr.mxu0 0.0
    %1247 = vmatpush1.msra.mxu0 0.0
    %1248 = vmatprep.subr.mxu0 0.0
    %1249 = vmatpush1.msra.mxu0 0.0
    %1250 = vmatprep.subr.mxu0 0.0
    %1251 = vmatpush1.msra.mxu0 0.0
    %1252 = vmatprep.subr.mxu0 0.0
    %1253 = vmatpush1.msra.mxu0 0.0
    %1254 = vmatprep.subr.mxu0 0.0
    %1255 = vmatpush1.msra.mxu0 0.0
    %1256 = vmatprep.subr.mxu0 0.0
    %1257 = vmatpush1.msra.mxu0 0.0
    %1258 = vmatprep.subr.mxu0 0.0
    %1259 = vmatpush1.msra.mxu0 0.0
    %1260 = vmatprep.subr.mxu0 0.0
    %1261 = vmatpush1.msra.mxu0 0.0
    %1262 = vmatprep.subr.mxu0 0.0
    %1263 = vmatpush1.msra.mxu0 0.0
    %1264 = vmatprep.subr.mxu0 0.0
    %1265 = vmatpush1.msra.mxu0 0.0
    %1266 = vmatprep.subr.mxu0 0.0
    %1267 = vmatpush1.msra.mxu0 0.0
    %1268 = vmatprep.mubr.f32.mxu0 0.0
    %1269 = vmatmul.mubr.f32.gmra.mrb[0].mxu0 %v926
    %v1270 = vpop.f32.mrb[0].mxu0
    %v1271 = vadd.f32 %v908, %v1270
    %v1272 = vpop.f32.mrb[0].mxu0
    %v1273 = vadd.f32 %v908, %v1272
    %1274 = vmatprep.mubr.f32.mxu0 0.0
    %1275 = vmatmul.mubr.f32.gmra.mrb[0].mxu0 %v929
    %v1276 = vpop.f32.mrb[0].mxu0
    %v1277 = vadd.f32 %v913, %v1276
    %v1278 = vpop.f32.mrb[0].mxu0
    %v1279 = vadd.f32 %v913, %v1278
    %1280 = vmatprep.mubr.f32.mxu0 0.0
    %1281 = vmatmul.mubr.f32.gmra.mrb[0].mxu0 %v932
    %v1282 = vpop.f32.mrb[0].mxu0
    %v1283 = vadd.f32 %v918, %v1282
    %v1284 = vpop.f32.mrb[0].mxu0
    %v1285 = vadd.f32 %v918, %v1284
    %1286 = vmatprep.mubr.f32.mxu0 0.0
    %1287 = vmatmul.mubr.f32.gmra.mrb[0].mxu0 %v935
    %v1288 = vpop.f32.mrb[0].mxu0
    %v1289 = vadd.f32 %v923, %v1288
    %v1290 = vpop.f32.mrb[0].mxu0
    %v1291 = vadd.f32 %v923, %v1290
    %1292 = vdwg.mxu0
    %v1293 = vtanh.pop %v1004
    %v1294 = vtanh.pop %v1006
    %v1295 = vtanh.pop %v1093
    %v1296 = vtanh.pop %v1095
    %v1297 = vtanh.pop %v1182
    %v1298 = vtanh.pop %v1184
    %v1299 = vtanh.pop %v1271
    %v1300 = vtanh.pop %v1273
    %v1301 = vtanh.pop %v1010
    %v1302 = vtanh.pop %v1012
    %v1303 = vtanh.pop %v1099
    %v1304 = vtanh.pop %v1101
    %v1305 = vtanh.pop %v1188
    %v1306 = vtanh.pop %v1190
    %v1307 = vtanh.pop %v1277
    %v1308 = vtanh.pop %v1279
    %v1309 = vtanh.pop %v1016
    %v1310 = vtanh.pop %v1018
    %v1311 = vtanh.pop %v1105
    %v1312 = vtanh.pop %v1107
    %v1313 = vtanh.pop %v1194
    %v1314 = vtanh.pop %v1196
    %v1315 = vtanh.pop %v1283
    %v1316 = vtanh.pop %v1285
    %v1317 = vtanh.pop %v1022
    %v1318 = vtanh.pop %v1024
    %v1319 = vtanh.pop %v1111
    %v1320 = vtanh.pop %v1113
    %v1321 = vtanh.pop %v1200
    %v1322 = vtanh.pop %v1202
    %v1323 = vtanh.pop %v1289
    %v1324 = vtanh.pop %v1291
    %v1325 = vld [vmem:[%s5] sm:$0xff]
    %v1326 = vld [vmem:[%s5 + $0x8] sm:$0xff]
    %v1327 = vld [vmem:[%s5 + $0x10] sm:$0xff]
    %v1328 = vld [vmem:[%s5 + $0x18] sm:$0xff]
    %1330 = vset.pattern.permute.xlu0 0
    %1331 = vperm.xlu0 %1330, %v1325
    %v1332 = vpop.permute.xlu0 %1331
    %1335 = vset.pattern.permute.xlu0 0
    %1336 = vperm.xlu0 %1335, %v1326
    %v1337 = vpop.permute.xlu0 %1336
    %1340 = vset.pattern.permute.xlu0 0
    %1341 = vperm.xlu0 %1340, %v1327
    %v1342 = vpop.permute.xlu0 %1341
    %1345 = vset.pattern.permute.xlu0 0
    %1346 = vperm.xlu0 %1345, %v1328
    %v1347 = vpop.permute.xlu0 %1346
    %v1349 = vmul.f32 %v1293, %v1332
    %v1350 = vmul.f32 %v1294, %v1332
    %v1351 = vmul.f32 %v1295, %v1332
    %v1352 = vmul.f32 %v1296, %v1332
    %v1353 = vmul.f32 %v1297, %v1332
    %v1354 = vmul.f32 %v1298, %v1332
    %v1355 = vmul.f32 %v1299, %v1332
    %v1356 = vmul.f32 %v1300, %v1332
    %v1357 = vmul.f32 %v1301, %v1337
    %v1358 = vmul.f32 %v1302, %v1337
    %v1359 = vmul.f32 %v1303, %v1337
    %v1360 = vmul.f32 %v1304, %v1337
    %v1361 = vmul.f32 %v1305, %v1337
    %v1362 = vmul.f32 %v1306, %v1337
    %v1363 = vmul.f32 %v1307, %v1337
    %v1364 = vmul.f32 %v1308, %v1337
    %v1365 = vmul.f32 %v1309, %v1342
    %v1366 = vmul.f32 %v1310, %v1342
    %v1367 = vmul.f32 %v1311, %v1342
    %v1368 = vmul.f32 %v1312, %v1342
    %v1369 = vmul.f32 %v1313, %v1342
    %v1370 = vmul.f32 %v1314, %v1342
    %v1371 = vmul.f32 %v1315, %v1342
    %v1372 = vmul.f32 %v1316, %v1342
    %v1373 = vmul.f32 %v1317, %v1347
    %v1374 = vmul.f32 %v1318, %v1347
    %v1375 = vmul.f32 %v1319, %v1347
    %v1376 = vmul.f32 %v1320, %v1347
    %v1377 = vmul.f32 %v1321, %v1347
    %v1378 = vmul.f32 %v1322, %v1347
    %v1379 = vmul.f32 %v1323, %v1347
    %v1380 = vmul.f32 %v1324, %v1347
    %v1381 = vadd.f32 %v1349, %v1357
    %v1382 = vadd.f32 %v1381, %v1365
    %v1383 = vadd.f32 %v1382, %v1373
    %v1384 = vrot.slane %v1383, 4
    %v1385 = vadd.f32 %v1383, %v1384
    %v1386 = vrot.slane %v1385, 2
    %v1387 = vadd.f32 %v1385, %v1386
    %v1388 = vrot.slane %v1387, 1
    %v1389 = vadd.f32 %v1387, %v1388
    %v1390 = vadd.f32 %v1350, %v1358
    %v1391 = vadd.f32 %v1390, %v1366
    %v1392 = vadd.f32 %v1391, %v1374
    %v1393 = vrot.slane %v1392, 4
    %v1394 = vadd.f32 %v1392, %v1393
    %v1395 = vrot.slane %v1394, 2
    %v1396 = vadd.f32 %v1394, %v1395
    %v1397 = vrot.slane %v1396, 1
    %v1398 = vadd.f32 %v1396, %v1397
    %v1399 = vadd.f32 %v1351, %v1359
    %v1400 = vadd.f32 %v1399, %v1367
    %v1401 = vadd.f32 %v1400, %v1375
    %v1402 = vrot.slane %v1401, 4
    %v1403 = vadd.f32 %v1401, %v1402
    %v1404 = vrot.slane %v1403, 2
    %v1405 = vadd.f32 %v1403, %v1404
    %v1406 = vrot.slane %v1405, 1
    %v1407 = vadd.f32 %v1405, %v1406
    %v1408 = vadd.f32 %v1352, %v1360
    %v1409 = vadd.f32 %v1408, %v1368
    %v1410 = vadd.f32 %v1409, %v1376
    %v1411 = vrot.slane %v1410, 4
    %v1412 = vadd.f32 %v1410, %v1411
    %v1413 = vrot.slane %v1412, 2
    %v1414 = vadd.f32 %v1412, %v1413
    %v1415 = vrot.slane %v1414, 1
    %v1416 = vadd.f32 %v1414, %v1415
    %v1417 = vadd.f32 %v1353, %v1361
    %v1418 = vadd.f32 %v1417, %v1369
    %v1419 = vadd.f32 %v1418, %v1377
    %v1420 = vrot.slane %v1419, 4
    %v1421 = vadd.f32 %v1419, %v1420
    %v1422 = vrot.slane %v1421, 2
    %v1423 = vadd.f32 %v1421, %v1422
    %v1424 = vrot.slane %v1423, 1
    %v1425 = vadd.f32 %v1423, %v1424
    %v1426 = vadd.f32 %v1354, %v1362
    %v1427 = vadd.f32 %v1426, %v1370
    %v1428 = vadd.f32 %v1427, %v1378
    %v1429 = vrot.slane %v1428, 4
    %v1430 = vadd.f32 %v1428, %v1429
    %v1431 = vrot.slane %v1430, 2
    %v1432 = vadd.f32 %v1430, %v1431
    %v1433 = vrot.slane %v1432, 1
    %v1434 = vadd.f32 %v1432, %v1433
    %v1435 = vadd.f32 %v1355, %v1363
    %v1436 = vadd.f32 %v1435, %v1371
    %v1437 = vadd.f32 %v1436, %v1379
    %v1438 = vrot.slane %v1437, 4
    %v1439 = vadd.f32 %v1437, %v1438
    %v1440 = vrot.slane %v1439, 2
    %v1441 = vadd.f32 %v1439, %v1440
    %v1442 = vrot.slane %v1441, 1
    %v1443 = vadd.f32 %v1441, %v1442
    %v1444 = vadd.f32 %v1356, %v1364
    %v1445 = vadd.f32 %v1444, %v1372
    %v1446 = vadd.f32 %v1445, %v1380
    %v1447 = vrot.slane %v1446, 4
    %v1448 = vadd.f32 %v1446, %v1447
    %v1449 = vrot.slane %v1448, 2
    %v1450 = vadd.f32 %v1448, %v1449
    %v1451 = vrot.slane %v1450, 1
    %v1452 = vadd.f32 %v1450, %v1451
    %v1453 = vld [vmem:[#allocation2] sm:$0x1]
    %1455 = vset.pattern.permute.xlu0 0
    %1456 = vperm.xlu0 %1455, %v1453
    %v1457 = vpop.permute.xlu0 %1456
    %v1459 = vlaneseq
    %v1460 = vshrl.u32 %v1459, 7
    %v1461 = vsub.s32 0, %v1460
    %v1462 = vrot.slane %v1457, %v1461
    %v1463 = vadd.f32 %v1389, %v1462
    %v1464 = vadd.f32 %v1398, %v1462
    %v1465 = vadd.f32 %v1407, %v1462
    %v1466 = vadd.f32 %v1416, %v1462
    %v1467 = vadd.f32 %v1425, %v1462
    %v1468 = vadd.f32 %v1434, %v1462
    %v1469 = vadd.f32 %v1443, %v1462
    %v1470 = vadd.f32 %v1452, %v1462
    %v1479 = vcombine.low %v1463, %v1464
    %v1480 = vcombine.low %v1465, %v1466
    %v1481 = vcombine.low %v1467, %v1468
    %v1482 = vcombine.low %v1469, %v1470
    %v1484 = vunpack.c.l.s4 1966171168
    %v1485 = vunpack.c.0.s8 %v1484
    %v1486 = vlaneseq
    %v1487 = vshrl.u32 %v1486, 7
    %v1488 = vsub.s32 %v1485, %v1487
    %v1489 = vrot.slane %v1479, %v1488
    %v1491 = vunpack.c.l.s4 1966171168
    %v1492 = vunpack.c.0.s8 %v1491
    %v1493 = vlaneseq
    %v1494 = vshrl.u32 %v1493, 7
    %v1495 = vsub.s32 %v1492, %v1494
    %v1496 = vrot.slane %v1480, %v1495
    %v1498 = vunpack.c.l.s4 1966171168
    %v1499 = vunpack.c.0.s8 %v1498
    %v1500 = vlaneseq
    %v1501 = vshrl.u32 %v1500, 7
    %v1502 = vsub.s32 %v1499, %v1501
    %v1503 = vrot.slane %v1481, %v1502
    %v1505 = vunpack.c.l.s4 1966171168
    %v1506 = vunpack.c.0.s8 %v1505
    %v1507 = vlaneseq
    %v1508 = vshrl.u32 %v1507, 7
    %v1509 = vsub.s32 %v1506, %v1508
    %v1510 = vrot.slane %v1482, %v1509
    %v1511 = vcombine.low %v1489, %v1496
    %v1512 = vcombine.low %v1503, %v1510
    %v1514 = vunpack.c.l.s4 1966171168
    %v1515 = vunpack.c.0.s8 %v1514
    %v1516 = vlaneseq
    %v1517 = vshrl.u32 %v1516, 7
    %v1518 = vsub.s32 %v1515, %v1517
    %v1519 = vrot.slane %v1511, %v1518
    %v1521 = vunpack.c.l.s4 1966171168
    %v1522 = vunpack.c.0.s8 %v1521
    %v1523 = vlaneseq
    %v1524 = vshrl.u32 %v1523, 7
    %v1525 = vsub.s32 %v1522, %v1524
    %v1526 = vrot.slane %v1512, %v1525
    %v1527 = vcombine.low %v1519, %v1526
    %1529 = vst [vmem:[#allocation3] sm:$0xff] %v1527
    // Predicated region
    $region30: #{tpu_custom_call.1} parent=1 // pred_check
      _
    $region31: #{tpu_custom_call.1} parent=1 // pred_check_branch
      %1531 = sbr.rel (0) target = $region33
    $region32: #{tpu_custom_call.1} parent=1 // pred_region
      %s1533 = ssub.s32 128, 128
      %1534 = vsyncadd [#allocation4], %s1533
      %s1536 = sshll.u32 [#allocation3], 4
      %s1537 = int_to_ptr.vmem [resolvable:$true] %s1536
      %1539 = dma.vmem_to_hbm [thread:$0]  %s1537, 128, %s7, [#allocation4]
    $region33: #{tpu_custom_call.1} parent=1 // pred_fallthru
      _
    // Predicated region
    $region34: #{tpu_custom_call.1} parent=1 // pred_check
      _
    $region35: #{tpu_custom_call.1} parent=1 // pred_check_branch
      %1541 = sbr.rel (0) target = $region37
    $region36: #{tpu_custom_call.1} parent=1 // pred_region
      %1542 = dma.done [#allocation4], 128
    $region37: #{tpu_custom_call.1} parent=1 // pred_fallthru
      _
    %1543 = vsyncpa [#allocation4], 1

</llo_original>
